<compile_context>
chip_gen: v7x
topology: tpu7x:2x2x1
jax: 0.10.0
libtpu: 0.0.40
codegen_flags: <defaults>
</compile_context>

<pallas_src>
import functools

import jax
import jax.numpy as jnp
from jax.experimental import pallas as pl
from jax.experimental.pallas import tpu as pltpu


def _round_up(n, m):
    return ((n + m - 1) // m) * m


def _mlp_kernel(x_ref, w1_ref, b1_ref, w2_ref, b2_ref, w3_ref, b3_ref, o_ref):
    # All three matmuls on the MXU with f32 accumulation; ReLU on the VPU.
    x = x_ref[...]
    h1 = jnp.dot(x, w1_ref[...], preferred_element_type=jnp.float32) + b1_ref[...]
    h1 = jnp.maximum(h1, 0.0)  # ReLU (padded lanes stay exactly 0)
    h2 = jnp.dot(h1, w2_ref[...], preferred_element_type=jnp.float32) + b2_ref[...]
    h2 = jnp.maximum(h2, 0.0)  # ReLU
    y = jnp.dot(h2, w3_ref[...], preferred_element_type=jnp.float32) + b3_ref[...]
    o_ref[...] = y.astype(o_ref.dtype)


@functools.partial(jax.jit, static_argnames=("n_cls",))
def intermediate_noisy_mlp_forward(x_nchw, padded_params, n_cls):
    """x_nchw: (B, C, H, W) float32. padded_params: lane-padded (in,out)/(1,out) arrays."""
    B = x_nchw.shape[0]
    x_flat = x_nchw.reshape(B, -1).astype(jnp.float32)  # same as torch .view(B, -1)
    D = x_flat.shape[1]

    w1, b1 = padded_params["w1"], padded_params["b1"]
    w2, b2 = padded_params["w2"], padded_params["b2"]
    w3, b3 = padded_params["w3"], padded_params["b3"]
    h1p, h2p, n_out_pad = w1.shape[1], w2.shape[1], w3.shape[1]

    # Batch tile: multiple of 8 (f32 sublane), up to 256 rows to fill the MXU M dim.
    TM = 256
    if B < TM:
        TM = max(8, _round_up(B, 8))
    nb = pl.cdiv(B, TM)
    B_pad = nb * TM
    if B_pad != B:
        x_flat = jnp.pad(x_flat, ((0, B_pad - B), (0, 0)))

    out = pl.pallas_call(
        _mlp_kernel,
        out_shape=jax.ShapeDtypeStruct((B_pad, n_out_pad), jnp.float32),
        grid=(nb,),
        in_specs=[
            # Activations: tiled over batch -> double-buffered DMA overlaps compute.
            pl.BlockSpec((TM, D), lambda i: (i, 0)),
            # Weights/biases: constant block index -> fetched once, stay resident.
            pl.BlockSpec((D, h1p), lambda i: (0, 0)),
            pl.BlockSpec((1, h1p), lambda i: (0, 0)),
            pl.BlockSpec((h1p, h2p), lambda i: (0, 0)),
            pl.BlockSpec((1, h2p), lambda i: (0, 0)),
            pl.BlockSpec((h2p, n_out_pad), lambda i: (0, 0)),
            pl.BlockSpec((1, n_out_pad), lambda i: (0, 0)),
        ],
        out_specs=pl.BlockSpec((TM, n_out_pad), lambda i: (i, 0)),
        compiler_params=pltpu.CompilerParams(
            dimension_semantics=("parallel",),  # shard batch tiles across v7x TCs
        ),
    )(x_flat, w1, b1, w2, b2, w3, b3)

    # Slice away batch padding and the zero-padded class lanes.
    return out[:B, :n_cls]


def init_params(key, input_dim, layer_dims=(300, 100), n_cls=10):
    """Deterministic synthetic init matching nn.Linear shapes.
    PyTorch Linear weight is (out, in); we store the transpose (in, out)."""
    dims = (input_dim,) + tuple(layer_dims) + (n_cls,)
    params = {}
    for i in range(3):
        fan_in, fan_out = dims[i], dims[i + 1]
        key, kw, kb = jax.random.split(key, 3)
        bound = 1.0 / (fan_in ** 0.5)
        params[f"w{i+1}"] = jax.random.uniform(
            kw, (fan_in, fan_out), jnp.float32, minval=-bound, maxval=bound)
        params[f"b{i+1}"] = jax.random.uniform(
            kb, (1, fan_out), jnp.float32, minval=-bound, maxval=bound)
    return params


def pad_params_for_tpu(params, lane=128):
    """Zero-pad feature dims to lane multiples (done once, outside the hot path).
    Out-dims pad to a multiple of `lane`; the next layer's in-dim pads to match."""
    padded = {}
    prev_out_pad = None
    for i in (1, 2, 3):
        w, b = params[f"w{i}"], params[f"b{i}"]
        fan_in, fan_out = w.shape
        in_pad = fan_in if i == 1 else prev_out_pad
        out_pad = _round_up(fan_out, lane)
        w_p = jnp.zeros((in_pad, out_pad), w.dtype).at[:fan_in, :fan_out].set(w)
        b_p = jnp.zeros((1, out_pad), b.dtype).at[:, :fan_out].set(b)
        padded[f"w{i}"] = w_p
        padded[f"b{i}"] = b_p
        prev_out_pad = out_pad
    return padded


def _reference_forward(x_nchw, params):
    x = x_nchw.reshape(x_nchw.shape[0], -1)
    h1 = jnp.maximum(x @ params["w1"] + params["b1"], 0.0)
    h2 = jnp.maximum(h1 @ params["w2"] + params["b2"], 0.0)
    return h2 @ params["w3"] + params["b3"]


if __name__ == "__main__":
    key = jax.random.PRNGKey(0)
    k_x, k_p = jax.random.split(key)

    # Small NCHW input consistent with the module's flatten-first forward.
    B, C, H, W = 2, 4, 16, 16
    input_dim = C * H * W  # 1024
    n_cls = 10

    x = jax.random.normal(k_x, (B, C, H, W), jnp.float32)
    params = init_params(k_p, input_dim, layer_dims=(300, 100), n_cls=n_cls)
    padded_params = pad_params_for_tpu(params)  # one-time lane padding

    y = intermediate_noisy_mlp_forward(x, padded_params, n_cls=n_cls)
    jax.block_until_ready(y)

    # Correctness check against plain-JAX reference (unpadded params).
    y_ref = _reference_forward(x, params)
    assert y.shape == (B, n_cls)
    assert jnp.allclose(y, y_ref, atol=1e-4, rtol=1e-4)

    print("KERNEL_OK")
</pallas_src>

<mosaic_0001>
module attributes {stable_mosaic.version = 11 : i64} {
  func.func @_mlp_kernel(%arg0: i32, %arg1: memref<8x1024xf32, #tpu.memory_space<vmem>>, %arg2: memref<1024x384xf32, #tpu.memory_space<vmem>>, %arg3: memref<1x384xf32, #tpu.memory_space<vmem>>, %arg4: memref<384x128xf32, #tpu.memory_space<vmem>>, %arg5: memref<1x128xf32, #tpu.memory_space<vmem>>, %arg6: memref<128x128xf32, #tpu.memory_space<vmem>>, %arg7: memref<1x128xf32, #tpu.memory_space<vmem>>, %arg8: memref<8x128xf32, #tpu.memory_space<vmem>>) attributes {dimension_semantics = [#tpu.dimension_semantics<parallel>], iteration_bounds = array<i64: 1>, scalar_prefetch = 0 : i64, scratch_operands = 0 : i64, tpu.core_type = #tpu.core_type<tc>, window_params = [{transform_indices = @transform_0, window_bounds = array<i64: 8, 1024>}, {pipeline_mode = #tpu.pipeline_mode<synchronous>, transform_indices = @transform_1, window_bounds = array<i64: 1024, 384>}, {pipeline_mode = #tpu.pipeline_mode<synchronous>, transform_indices = @transform_2, window_bounds = array<i64: 1, 384>}, {pipeline_mode = #tpu.pipeline_mode<synchronous>, transform_indices = @transform_3, window_bounds = array<i64: 384, 128>}, {pipeline_mode = #tpu.pipeline_mode<synchronous>, transform_indices = @transform_4, window_bounds = array<i64: 1, 128>}, {pipeline_mode = #tpu.pipeline_mode<synchronous>, transform_indices = @transform_5, window_bounds = array<i64: 128, 128>}, {pipeline_mode = #tpu.pipeline_mode<synchronous>, transform_indices = @transform_6, window_bounds = array<i64: 1, 128>}, {transform_indices = @transform_7, window_bounds = array<i64: 8, 128>}]} {
    %c0 = arith.constant 0 : index
    %c0_0 = arith.constant 0 : index
    %0 = vector.load %arg1[%c0, %c0_0] : memref<8x1024xf32, #tpu.memory_space<vmem>>, vector<8x1024xf32>
    %c0_1 = arith.constant 0 : index
    %c0_2 = arith.constant 0 : index
    %1 = vector.load %arg2[%c0_1, %c0_2] : memref<1024x384xf32, #tpu.memory_space<vmem>>, vector<1024x384xf32>
    %cst = arith.constant dense<0.000000e+00> : vector<8x384xf32>
    %2 = tpu.matmul %0, %1, %cst {dimension_numbers = #tpu.dot_dimension_numbers<[1], [0], [0], [1], [0, 0, 1, 1], [], []>} : vector<8x1024xf32>, vector<1024x384xf32>, vector<8x384xf32> -> vector<8x384xf32>
    %c0_3 = arith.constant 0 : index
    %c0_4 = arith.constant 0 : index
    %3 = vector.load %arg3[%c0_3, %c0_4] : memref<1x384xf32, #tpu.memory_space<vmem>>, vector<1x384xf32>
    %4 = vector.broadcast %3 : vector<1x384xf32> to vector<8x384xf32>
    %5 = arith.addf %2, %4 : vector<8x384xf32>
    %cst_5 = arith.constant 0.000000e+00 : f32
    %6 = vector.broadcast %cst_5 : f32 to vector<8x384xf32>
    %7 = arith.maximumf %5, %6 : vector<8x384xf32>
    %c0_6 = arith.constant 0 : index
    %c0_7 = arith.constant 0 : index
    %8 = vector.load %arg4[%c0_6, %c0_7] : memref<384x128xf32, #tpu.memory_space<vmem>>, vector<384x128xf32>
    %cst_8 = arith.constant dense<0.000000e+00> : vector<8x128xf32>
    %9 = tpu.matmul %7, %8, %cst_8 {dimension_numbers = #tpu.dot_dimension_numbers<[1], [0], [0], [1], [0, 0, 1, 1], [], []>} : vector<8x384xf32>, vector<384x128xf32>, vector<8x128xf32> -> vector<8x128xf32>
    %c0_9 = arith.constant 0 : index
    %c0_10 = arith.constant 0 : index
    %10 = vector.load %arg5[%c0_9, %c0_10] : memref<1x128xf32, #tpu.memory_space<vmem>>, vector<1x128xf32>
    %11 = vector.broadcast %10 : vector<1x128xf32> to vector<8x128xf32>
    %12 = arith.addf %9, %11 : vector<8x128xf32>
    %cst_11 = arith.constant 0.000000e+00 : f32
    %13 = vector.broadcast %cst_11 : f32 to vector<8x128xf32>
    %14 = arith.maximumf %12, %13 : vector<8x128xf32>
    %c0_12 = arith.constant 0 : index
    %c0_13 = arith.constant 0 : index
    %15 = vector.load %arg6[%c0_12, %c0_13] : memref<128x128xf32, #tpu.memory_space<vmem>>, vector<128x128xf32>
    %cst_14 = arith.constant dense<0.000000e+00> : vector<8x128xf32>
    %16 = tpu.matmul %14, %15, %cst_14 {dimension_numbers = #tpu.dot_dimension_numbers<[1], [0], [0], [1], [0, 0, 1, 1], [], []>} : vector<8x128xf32>, vector<128x128xf32>, vector<8x128xf32> -> vector<8x128xf32>
    %c0_15 = arith.constant 0 : index
    %c0_16 = arith.constant 0 : index
    %17 = vector.load %arg7[%c0_15, %c0_16] : memref<1x128xf32, #tpu.memory_space<vmem>>, vector<1x128xf32>
    %18 = vector.broadcast %17 : vector<1x128xf32> to vector<8x128xf32>
    %19 = arith.addf %16, %18 : vector<8x128xf32>
    %c0_17 = arith.constant 0 : index
    %c0_18 = arith.constant 0 : index
    %20 = vector.load %arg8[%c0_17, %c0_18] : memref<8x128xf32, #tpu.memory_space<vmem>>, vector<8x128xf32>
    tpu.vector_store %arg8[%c0_17, %c0_18], %19 {strides = array<i32>} : memref<8x128xf32, #tpu.memory_space<vmem>>, vector<8x128xf32>,
    return
  }
  func.func @transform_0(%arg0: i32) -> (i32, i32) {
    %c0_i32 = arith.constant 0 : i32
    %c0_i32_0 = arith.constant 0 : i32
    return %arg0, %c0_i32 : i32, i32
  }
  func.func @transform_1(%arg0: i32) -> (i32, i32) {
    %c0_i32 = arith.constant 0 : i32
    %c0_i32_0 = arith.constant 0 : i32
    %c0_i32_1 = arith.constant 0 : i32
    return %c0_i32, %c0_i32_0 : i32, i32
  }
  func.func @transform_2(%arg0: i32) -> (i32, i32) {
    %c0_i32 = arith.constant 0 : i32
    %c0_i32_0 = arith.constant 0 : i32
    %c0_i32_1 = arith.constant 0 : i32
    return %c0_i32, %c0_i32_0 : i32, i32
  }
  func.func @transform_3(%arg0: i32) -> (i32, i32) {
    %c0_i32 = arith.constant 0 : i32
    %c0_i32_0 = arith.constant 0 : i32
    %c0_i32_1 = arith.constant 0 : i32
    return %c0_i32, %c0_i32_0 : i32, i32
  }
  func.func @transform_4(%arg0: i32) -> (i32, i32) {
    %c0_i32 = arith.constant 0 : i32
    %c0_i32_0 = arith.constant 0 : i32
    %c0_i32_1 = arith.constant 0 : i32
    return %c0_i32, %c0_i32_0 : i32, i32
  }
  func.func @transform_5(%arg0: i32) -> (i32, i32) {
    %c0_i32 = arith.constant 0 : i32
    %c0_i32_0 = arith.constant 0 : i32
    %c0_i32_1 = arith.constant 0 : i32
    return %c0_i32, %c0_i32_0 : i32, i32
  }
  func.func @transform_6(%arg0: i32) -> (i32, i32) {
    %c0_i32 = arith.constant 0 : i32
    %c0_i32_0 = arith.constant 0 : i32
    %c0_i32_1 = arith.constant 0 : i32
    return %c0_i32, %c0_i32_0 : i32, i32
  }
  func.func @transform_7(%arg0: i32) -> (i32, i32) {
    %c0_i32 = arith.constant 0 : i32
    %c0_i32_0 = arith.constant 0 : i32
    return %arg0, %c0_i32 : i32, i32
  }
}

</mosaic_0001>

<llo_original>
// kernel: intermediate_noisy_mlp_forward.1
$region0: #{intermediate_noisy_mlp_forward.1}
  #allocation0 [shape = 'u32[]', space=smem, size = 0x4, offset = 0x4, fixed_abs, tag = 'smem constant byte address 0x4 - core index']
  #allocation1 [shape = 'u32[144,128]{1,0:T(1,128)}', space=vmem, size = 0x12000, scoped, tag = 'internal scratch']
  %s0 = inlined_call_operand.vmem [shape: f32[8,1024], index: 0, kind: input, shape index: {}]
  %s1 = inlined_call_operand.hbm [shape: f32[1024,384], index: 1, kind: input, shape index: {}]
  %s2 = inlined_call_operand.hbm [shape: f32[1,384], index: 2, kind: input, shape index: {}]
  %s3 = inlined_call_operand.hbm [shape: f32[384,128], index: 3, kind: input, shape index: {}]
  %s4 = inlined_call_operand.hbm [shape: f32[1,128], index: 4, kind: input, shape index: {}]
  %s5 = inlined_call_operand.hbm [shape: f32[128,128], index: 5, kind: input, shape index: {}]
  %s6 = inlined_call_operand.hbm [shape: f32[1,128], index: 6, kind: input, shape index: {}]
  %s7 = inlined_call_operand.vmem [shape: f32[8,128], index: 7, kind: output, shape index: {}]
  %s8 = sld [smem:[#allocation0]]
  $region62: #{intermediate_noisy_mlp_forward.1} parent=0
    _
  %s10 = ssub.s32 1, %s8
  %s11 = scalar_select 0, %s10, %s8
  $region1: #{intermediate_noisy_mlp_forward.1} parent=0
    #allocation2 [shape = 'u8[1572864]{0}', space=vmem, size = 0x180000, scoped, tag = 'input window, operand 1, single buffered']
    #allocation3 [shape = 's32[1]{0}', space=sflag, size = 0x4, scoped, tag = 'scoped memory for intermediate_noisy_mlp_forward.1']
    #allocation4 [shape = 'u8[1536]{0}', space=vmem, size = 0x800, scoped, tag = 'input window, operand 2, single buffered']
    #allocation5 [shape = 's32[1]{0}', space=sflag, size = 0x4, scoped, tag = 'scoped memory for intermediate_noisy_mlp_forward.1']
    #allocation6 [shape = 'u8[196608]{0}', space=vmem, size = 0x30000, scoped, tag = 'input window, operand 3, single buffered']
    #allocation7 [shape = 'u8[512]{0}', space=vmem, size = 0x400, scoped, tag = 'input window, operand 4, single buffered']
    #allocation8 [shape = 's32[1]{0}', space=sflag, size = 0x4, scoped, tag = 'scoped memory for intermediate_noisy_mlp_forward.1']
    #allocation9 [shape = 'u8[65536]{0}', space=vmem, size = 0x10000, scoped, tag = 'input window, operand 5, single buffered']
    #allocation10 [shape = 'u8[512]{0}', space=vmem, size = 0x400, scoped, tag = 'input window, operand 6, single buffered']
    #allocation11 [shape = 's32[1]{0}', space=sflag, size = 0x4, scoped, tag = 'scoped memory for intermediate_noisy_mlp_forward.1']
    %12 = vsyncpa [#allocation3], 0
    %13 = vsyncpa [#allocation5], 0
    %14 = vsyncpa [#allocation8], 0
    %15 = vsyncpa [#allocation11], 0
    // Predicated region
    $region2: #{intermediate_noisy_mlp_forward.1} parent=1 // pred_check
      _
    $region3: #{intermediate_noisy_mlp_forward.1} parent=1 // pred_check_branch
      %17 = sbr.rel (0) target = $region5
    $region4: #{intermediate_noisy_mlp_forward.1} parent=1 // pred_region
      _
    $region5: #{intermediate_noisy_mlp_forward.1} parent=1 // pred_fallthru
      _
    // Predicated region
    $region6: #{intermediate_noisy_mlp_forward.1} parent=1 // pred_check
      _
    $region7: #{intermediate_noisy_mlp_forward.1} parent=1 // pred_check_branch
      %19 = sbr.rel (0) target = $region9
    $region8: #{intermediate_noisy_mlp_forward.1} parent=1 // pred_region
      %s21 = ssub.s32 49152, 49152
      %22 = vsyncadd [#allocation3], %s21
      %s23 = sshll.u32 [#allocation2], 4
      %s24 = int_to_ptr.vmem [resolvable:$true] %s23
      %29 = dma.hbm_to_vmem [thread:$0]  %s1, 49152, %s24, [#allocation3], 384, 384, 24
    $region9: #{intermediate_noisy_mlp_forward.1} parent=1 // pred_fallthru
      _
    // Predicated region
    $region10: #{intermediate_noisy_mlp_forward.1} parent=1 // pred_check
      _
    $region11: #{intermediate_noisy_mlp_forward.1} parent=1 // pred_check_branch
      %31 = sbr.rel (0) target = $region13
    $region12: #{intermediate_noisy_mlp_forward.1} parent=1 // pred_region
      %s33 = ssub.s32 48, 48
      %34 = vsyncadd [#allocation5], %s33
      %s36 = sshll.u32 [#allocation4], 4
      %s37 = int_to_ptr.vmem [resolvable:$true] %s36
      %39 = dma.hbm_to_vmem [thread:$0]  %s2, 48, %s37, [#allocation5]
    $region13: #{intermediate_noisy_mlp_forward.1} parent=1 // pred_fallthru
      _
    // Predicated region
    $region14: #{intermediate_noisy_mlp_forward.1} parent=1 // pred_check
      _
    $region15: #{intermediate_noisy_mlp_forward.1} parent=1 // pred_check_branch
      %41 = sbr.rel (0) target = $region17
    $region16: #{intermediate_noisy_mlp_forward.1} parent=1 // pred_region
      %s43 = ssub.s32 6144, 6144
      %44 = vsyncadd [#allocation5], %s43
      %s45 = sshll.u32 [#allocation6], 4
      %s46 = int_to_ptr.vmem [resolvable:$true] %s45
      %51 = dma.hbm_to_vmem [thread:$0]  %s3, 6144, %s46, [#allocation5], 128, 128, 8
    $region17: #{intermediate_noisy_mlp_forward.1} parent=1 // pred_fallthru
      _
    // Predicated region
    $region18: #{intermediate_noisy_mlp_forward.1} parent=1 // pred_check
      _
    $region19: #{intermediate_noisy_mlp_forward.1} parent=1 // pred_check_branch
      %53 = sbr.rel (0) target = $region21
    $region20: #{intermediate_noisy_mlp_forward.1} parent=1 // pred_region
      %s55 = ssub.s32 16, 16
      %56 = vsyncadd [#allocation8], %s55
      %s58 = sshll.u32 [#allocation7], 4
      %s59 = int_to_ptr.vmem [resolvable:$true] %s58
      %61 = dma.hbm_to_vmem [thread:$0]  %s4, 16, %s59, [#allocation8]
    $region21: #{intermediate_noisy_mlp_forward.1} parent=1 // pred_fallthru
      _
    // Predicated region
    $region22: #{intermediate_noisy_mlp_forward.1} parent=1 // pred_check
      _
    $region23: #{intermediate_noisy_mlp_forward.1} parent=1 // pred_check_branch
      %63 = sbr.rel (0) target = $region25
    $region24: #{intermediate_noisy_mlp_forward.1} parent=1 // pred_region
      %s65 = ssub.s32 2048, 2048
      %66 = vsyncadd [#allocation8], %s65
      %s67 = sshll.u32 [#allocation9], 4
      %s68 = int_to_ptr.vmem [resolvable:$true] %s67
      %73 = dma.hbm_to_vmem [thread:$0]  %s5, 2048, %s68, [#allocation8], 128, 128, 8
    $region25: #{intermediate_noisy_mlp_forward.1} parent=1 // pred_fallthru
      _
    // Predicated region
    $region26: #{intermediate_noisy_mlp_forward.1} parent=1 // pred_check
      _
    $region27: #{intermediate_noisy_mlp_forward.1} parent=1 // pred_check_branch
      %75 = sbr.rel (0) target = $region29
    $region28: #{intermediate_noisy_mlp_forward.1} parent=1 // pred_region
      %s77 = ssub.s32 16, 16
      %78 = vsyncadd [#allocation11], %s77
      %s80 = sshll.u32 [#allocation10], 4
      %s81 = int_to_ptr.vmem [resolvable:$true] %s80
      %83 = dma.hbm_to_vmem [thread:$0]  %s6, 16, %s81, [#allocation11]
    $region29: #{intermediate_noisy_mlp_forward.1} parent=1 // pred_fallthru
      _
    // Predicated region
    $region30: #{intermediate_noisy_mlp_forward.1} parent=1 // pred_check
      _
    $region31: #{intermediate_noisy_mlp_forward.1} parent=1 // pred_check_branch
      %85 = sbr.rel (0) target = $region33
    $region32: #{intermediate_noisy_mlp_forward.1} parent=1 // pred_region
      %86 = dma.done [#allocation3], 49152
    $region33: #{intermediate_noisy_mlp_forward.1} parent=1 // pred_fallthru
      _
    // Predicated region
    $region34: #{intermediate_noisy_mlp_forward.1} parent=1 // pred_check
      _
    $region35: #{intermediate_noisy_mlp_forward.1} parent=1 // pred_check_branch
      %88 = sbr.rel (0) target = $region37
    $region36: #{intermediate_noisy_mlp_forward.1} parent=1 // pred_region
      %89 = dma.done [#allocation5], 48
    $region37: #{intermediate_noisy_mlp_forward.1} parent=1 // pred_fallthru
      _
    // Predicated region
    $region38: #{intermediate_noisy_mlp_forward.1} parent=1 // pred_check
      _
    $region39: #{intermediate_noisy_mlp_forward.1} parent=1 // pred_check_branch
      %91 = sbr.rel (0) target = $region41
    $region40: #{intermediate_noisy_mlp_forward.1} parent=1 // pred_region
      %92 = dma.done [#allocation5], 6144
    $region41: #{intermediate_noisy_mlp_forward.1} parent=1 // pred_fallthru
      _
    // Predicated region
    $region42: #{intermediate_noisy_mlp_forward.1} parent=1 // pred_check
      _
    $region43: #{intermediate_noisy_mlp_forward.1} parent=1 // pred_check_branch
      %94 = sbr.rel (0) target = $region45
    $region44: #{intermediate_noisy_mlp_forward.1} parent=1 // pred_region
      %95 = dma.done [#allocation8], 16
    $region45: #{intermediate_noisy_mlp_forward.1} parent=1 // pred_fallthru
      _
    // Predicated region
    $region46: #{intermediate_noisy_mlp_forward.1} parent=1 // pred_check
      _
    $region47: #{intermediate_noisy_mlp_forward.1} parent=1 // pred_check_branch
      %97 = sbr.rel (0) target = $region49
    $region48: #{intermediate_noisy_mlp_forward.1} parent=1 // pred_region
      %98 = dma.done [#allocation8], 2048
    $region49: #{intermediate_noisy_mlp_forward.1} parent=1 // pred_fallthru
      _
    // Predicated region
    $region50: #{intermediate_noisy_mlp_forward.1} parent=1 // pred_check
      _
    $region51: #{intermediate_noisy_mlp_forward.1} parent=1 // pred_check_branch
      %100 = sbr.rel (0) target = $region53
    $region52: #{intermediate_noisy_mlp_forward.1} parent=1 // pred_region
      %101 = dma.done [#allocation11], 16
    $region53: #{intermediate_noisy_mlp_forward.1} parent=1 // pred_fallthru
      _
    %v102 = vld [vmem:[%s0] sm:$0xff]
    %v103 = vld [vmem:[%s0 + $0x8] sm:$0xff]
    %v104 = vld [vmem:[%s0 + $0x10] sm:$0xff]
    %v105 = vld [vmem:[%s0 + $0x18] sm:$0xff]
    %v106 = vld [vmem:[%s0 + $0x20] sm:$0xff]
    %v107 = vld [vmem:[%s0 + $0x28] sm:$0xff]
    %v108 = vld [vmem:[%s0 + $0x30] sm:$0xff]
    %v109 = vld [vmem:[%s0 + $0x38] sm:$0xff]
    %v110 = vld [vmem:[#allocation2] sm:$0xff]
    %v111 = vld [vmem:[#allocation2 + $0x8] sm:$0xff]
    %v112 = vld [vmem:[#allocation2 + $0x10] sm:$0xff]
    %v113 = vld [vmem:[#allocation2 + $0x18] sm:$0xff]
    %v114 = vld [vmem:[#allocation2 + $0x20] sm:$0xff]
    %v115 = vld [vmem:[#allocation2 + $0x28] sm:$0xff]
    %v116 = vld [vmem:[#allocation2 + $0x30] sm:$0xff]
    %v117 = vld [vmem:[#allocation2 + $0x38] sm:$0xff]
    %v118 = vld [vmem:[#allocation2 + $0x40] sm:$0xff]
    %v119 = vld [vmem:[#allocation2 + $0x48] sm:$0xff]
    %v120 = vld [vmem:[#allocation2 + $0x50] sm:$0xff]
    %v121 = vld [vmem:[#allocation2 + $0x58] sm:$0xff]
    %v122 = vld [vmem:[#allocation2 + $0x60] sm:$0xff]
    %v123 = vld [vmem:[#allocation2 + $0x68] sm:$0xff]
    %v124 = vld [vmem:[#allocation2 + $0x70] sm:$0xff]
    %v125 = vld [vmem:[#allocation2 + $0x78] sm:$0xff]
    %v126 = vld [vmem:[#allocation2 + $0x80] sm:$0xff]
    %v127 = vld [vmem:[#allocation2 + $0x88] sm:$0xff]
    %v128 = vld [vmem:[#allocation2 + $0x90] sm:$0xff]
    %v129 = vld [vmem:[#allocation2 + $0x98] sm:$0xff]
    %v130 = vld [vmem:[#allocation2 + $0xa0] sm:$0xff]
    %v131 = vld [vmem:[#allocation2 + $0xa8] sm:$0xff]
    %v132 = vld [vmem:[#allocation2 + $0xb0] sm:$0xff]
    %v133 = vld [vmem:[#allocation2 + $0xb8] sm:$0xff]
    %v134 = vld [vmem:[#allocation2 + $0xc0] sm:$0xff]
    %v135 = vld [vmem:[#allocation2 + $0xc8] sm:$0xff]
    %v136 = vld [vmem:[#allocation2 + $0xd0] sm:$0xff]
    %v137 = vld [vmem:[#allocation2 + $0xd8] sm:$0xff]
    %v138 = vld [vmem:[#allocation2 + $0xe0] sm:$0xff]
    %v139 = vld [vmem:[#allocation2 + $0xe8] sm:$0xff]
    %v140 = vld [vmem:[#allocation2 + $0xf0] sm:$0xff]
    %v141 = vld [vmem:[#allocation2 + $0xf8] sm:$0xff]
    %v142 = vld [vmem:[#allocation2 + $0x100] sm:$0xff]
    %v143 = vld [vmem:[#allocation2 + $0x108] sm:$0xff]
    %v144 = vld [vmem:[#allocation2 + $0x110] sm:$0xff]
    %v145 = vld [vmem:[#allocation2 + $0x118] sm:$0xff]
    %v146 = vld [vmem:[#allocation2 + $0x120] sm:$0xff]
    %v147 = vld [vmem:[#allocation2 + $0x128] sm:$0xff]
    %v148 = vld [vmem:[#allocation2 + $0x130] sm:$0xff]
    %v149 = vld [vmem:[#allocation2 + $0x138] sm:$0xff]
    %v150 = vld [vmem:[#allocation2 + $0x140] sm:$0xff]
    %v151 = vld [vmem:[#allocation2 + $0x148] sm:$0xff]
    %v152 = vld [vmem:[#allocation2 + $0x150] sm:$0xff]
    %v153 = vld [vmem:[#allocation2 + $0x158] sm:$0xff]
    %v154 = vld [vmem:[#allocation2 + $0x160] sm:$0xff]
    %v155 = vld [vmem:[#allocation2 + $0x168] sm:$0xff]
    %v156 = vld [vmem:[#allocation2 + $0x170] sm:$0xff]
    %v157 = vld [vmem:[#allocation2 + $0x178] sm:$0xff]
    %v158 = vld [vmem:[#allocation2 + $0x180] sm:$0xff]
    %v159 = vld [vmem:[#allocation2 + $0x188] sm:$0xff]
    %v160 = vld [vmem:[#allocation2 + $0x190] sm:$0xff]
    %v161 = vld [vmem:[#allocation2 + $0x198] sm:$0xff]
    %v162 = vld [vmem:[#allocation2 + $0x1a0] sm:$0xff]
    %v163 = vld [vmem:[#allocation2 + $0x1a8] sm:$0xff]
    %v164 = vld [vmem:[#allocation2 + $0x1b0] sm:$0xff]
    %v165 = vld [vmem:[#allocation2 + $0x1b8] sm:$0xff]
    %v166 = vld [vmem:[#allocation2 + $0x1c0] sm:$0xff]
    %v167 = vld [vmem:[#allocation2 + $0x1c8] sm:$0xff]
    %v168 = vld [vmem:[#allocation2 + $0x1d0] sm:$0xff]
    %v169 = vld [vmem:[#allocation2 + $0x1d8] sm:$0xff]
    %v170 = vld [vmem:[#allocation2 + $0x1e0] sm:$0xff]
    %v171 = vld [vmem:[#allocation2 + $0x1e8] sm:$0xff]
    %v172 = vld [vmem:[#allocation2 + $0x1f0] sm:$0xff]
    %v173 = vld [vmem:[#allocation2 + $0x1f8] sm:$0xff]
    %v174 = vld [vmem:[#allocation2 + $0x200] sm:$0xff]
    %v175 = vld [vmem:[#allocation2 + $0x208] sm:$0xff]
    %v176 = vld [vmem:[#allocation2 + $0x210] sm:$0xff]
    %v177 = vld [vmem:[#allocation2 + $0x218] sm:$0xff]
    %v178 = vld [vmem:[#allocation2 + $0x220] sm:$0xff]
    %v179 = vld [vmem:[#allocation2 + $0x228] sm:$0xff]
    %v180 = vld [vmem:[#allocation2 + $0x230] sm:$0xff]
    %v181 = vld [vmem:[#allocation2 + $0x238] sm:$0xff]
    %v182 = vld [vmem:[#allocation2 + $0x240] sm:$0xff]
    %v183 = vld [vmem:[#allocation2 + $0x248] sm:$0xff]
    %v184 = vld [vmem:[#allocation2 + $0x250] sm:$0xff]
    %v185 = vld [vmem:[#allocation2 + $0x258] sm:$0xff]
    %v186 = vld [vmem:[#allocation2 + $0x260] sm:$0xff]
    %v187 = vld [vmem:[#allocation2 + $0x268] sm:$0xff]
    %v188 = vld [vmem:[#allocation2 + $0x270] sm:$0xff]
    %v189 = vld [vmem:[#allocation2 + $0x278] sm:$0xff]
    %v190 = vld [vmem:[#allocation2 + $0x280] sm:$0xff]
    %v191 = vld [vmem:[#allocation2 + $0x288] sm:$0xff]
    %v192 = vld [vmem:[#allocation2 + $0x290] sm:$0xff]
    %v193 = vld [vmem:[#allocation2 + $0x298] sm:$0xff]
    %v194 = vld [vmem:[#allocation2 + $0x2a0] sm:$0xff]
    %v195 = vld [vmem:[#allocation2 + $0x2a8] sm:$0xff]
    %v196 = vld [vmem:[#allocation2 + $0x2b0] sm:$0xff]
    %v197 = vld [vmem:[#allocation2 + $0x2b8] sm:$0xff]
    %v198 = vld [vmem:[#allocation2 + $0x2c0] sm:$0xff]
    %v199 = vld [vmem:[#allocation2 + $0x2c8] sm:$0xff]
    %v200 = vld [vmem:[#allocation2 + $0x2d0] sm:$0xff]
    %v201 = vld [vmem:[#allocation2 + $0x2d8] sm:$0xff]
    %v202 = vld [vmem:[#allocation2 + $0x2e0] sm:$0xff]
    %v203 = vld [vmem:[#allocation2 + $0x2e8] sm:$0xff]
    %v204 = vld [vmem:[#allocation2 + $0x2f0] sm:$0xff]
    %v205 = vld [vmem:[#allocation2 + $0x2f8] sm:$0xff]
    %v206 = vld [vmem:[#allocation2 + $0x300] sm:$0xff]
    %v207 = vld [vmem:[#allocation2 + $0x308] sm:$0xff]
    %v208 = vld [vmem:[#allocation2 + $0x310] sm:$0xff]
    %v209 = vld [vmem:[#allocation2 + $0x318] sm:$0xff]
    %v210 = vld [vmem:[#allocation2 + $0x320] sm:$0xff]
    %v211 = vld [vmem:[#allocation2 + $0x328] sm:$0xff]
    %v212 = vld [vmem:[#allocation2 + $0x330] sm:$0xff]
    %v213 = vld [vmem:[#allocation2 + $0x338] sm:$0xff]
    %v214 = vld [vmem:[#allocation2 + $0x340] sm:$0xff]
    %v215 = vld [vmem:[#allocation2 + $0x348] sm:$0xff]
    %v216 = vld [vmem:[#allocation2 + $0x350] sm:$0xff]
    %v217 = vld [vmem:[#allocation2 + $0x358] sm:$0xff]
    %v218 = vld [vmem:[#allocation2 + $0x360] sm:$0xff]
    %v219 = vld [vmem:[#allocation2 + $0x368] sm:$0xff]
    %v220 = vld [vmem:[#allocation2 + $0x370] sm:$0xff]
    %v221 = vld [vmem:[#allocation2 + $0x378] sm:$0xff]
    %v222 = vld [vmem:[#allocation2 + $0x380] sm:$0xff]
    %v223 = vld [vmem:[#allocation2 + $0x388] sm:$0xff]
    %v224 = vld [vmem:[#allocation2 + $0x390] sm:$0xff]
    %v225 = vld [vmem:[#allocation2 + $0x398] sm:$0xff]
    %v226 = vld [vmem:[#allocation2 + $0x3a0] sm:$0xff]
    %v227 = vld [vmem:[#allocation2 + $0x3a8] sm:$0xff]
    %v228 = vld [vmem:[#allocation2 + $0x3b0] sm:$0xff]
    %v229 = vld [vmem:[#allocation2 + $0x3b8] sm:$0xff]
    %v230 = vld [vmem:[#allocation2 + $0x3c0] sm:$0xff]
    %v231 = vld [vmem:[#allocation2 + $0x3c8] sm:$0xff]
    %v232 = vld [vmem:[#allocation2 + $0x3d0] sm:$0xff]
    %v233 = vld [vmem:[#allocation2 + $0x3d8] sm:$0xff]
    %v234 = vld [vmem:[#allocation2 + $0x3e0] sm:$0xff]
    %v235 = vld [vmem:[#allocation2 + $0x3e8] sm:$0xff]
    %v236 = vld [vmem:[#allocation2 + $0x3f0] sm:$0xff]
    %v237 = vld [vmem:[#allocation2 + $0x3f8] sm:$0xff]
    %v238 = vld [vmem:[#allocation2 + $0x400] sm:$0xff]
    %v239 = vld [vmem:[#allocation2 + $0x408] sm:$0xff]
    %v240 = vld [vmem:[#allocation2 + $0x410] sm:$0xff]
    %v241 = vld [vmem:[#allocation2 + $0x418] sm:$0xff]
    %v242 = vld [vmem:[#allocation2 + $0x420] sm:$0xff]
    %v243 = vld [vmem:[#allocation2 + $0x428] sm:$0xff]
    %v244 = vld [vmem:[#allocation2 + $0x430] sm:$0xff]
    %v245 = vld [vmem:[#allocation2 + $0x438] sm:$0xff]
    %v246 = vld [vmem:[#allocation2 + $0x440] sm:$0xff]
    %v247 = vld [vmem:[#allocation2 + $0x448] sm:$0xff]
    %v248 = vld [vmem:[#allocation2 + $0x450] sm:$0xff]
    %v249 = vld [vmem:[#allocation2 + $0x458] sm:$0xff]
    %v250 = vld [vmem:[#allocation2 + $0x460] sm:$0xff]
    %v251 = vld [vmem:[#allocation2 + $0x468] sm:$0xff]
    %v252 = vld [vmem:[#allocation2 + $0x470] sm:$0xff]
    %v253 = vld [vmem:[#allocation2 + $0x478] sm:$0xff]
    %v254 = vld [vmem:[#allocation2 + $0x480] sm:$0xff]
    %v255 = vld [vmem:[#allocation2 + $0x488] sm:$0xff]
    %v256 = vld [vmem:[#allocation2 + $0x490] sm:$0xff]
    %v257 = vld [vmem:[#allocation2 + $0x498] sm:$0xff]
    %v258 = vld [vmem:[#allocation2 + $0x4a0] sm:$0xff]
    %v259 = vld [vmem:[#allocation2 + $0x4a8] sm:$0xff]
    %v260 = vld [vmem:[#allocation2 + $0x4b0] sm:$0xff]
    %v261 = vld [vmem:[#allocation2 + $0x4b8] sm:$0xff]
    %v262 = vld [vmem:[#allocation2 + $0x4c0] sm:$0xff]
    %v263 = vld [vmem:[#allocation2 + $0x4c8] sm:$0xff]
    %v264 = vld [vmem:[#allocation2 + $0x4d0] sm:$0xff]
    %v265 = vld [vmem:[#allocation2 + $0x4d8] sm:$0xff]
    %v266 = vld [vmem:[#allocation2 + $0x4e0] sm:$0xff]
    %v267 = vld [vmem:[#allocation2 + $0x4e8] sm:$0xff]
    %v268 = vld [vmem:[#allocation2 + $0x4f0] sm:$0xff]
    %v269 = vld [vmem:[#allocation2 + $0x4f8] sm:$0xff]
    %v270 = vld [vmem:[#allocation2 + $0x500] sm:$0xff]
    %v271 = vld [vmem:[#allocation2 + $0x508] sm:$0xff]
    %v272 = vld [vmem:[#allocation2 + $0x510] sm:$0xff]
    %v273 = vld [vmem:[#allocation2 + $0x518] sm:$0xff]
    %v274 = vld [vmem:[#allocation2 + $0x520] sm:$0xff]
    %v275 = vld [vmem:[#allocation2 + $0x528] sm:$0xff]
    %v276 = vld [vmem:[#allocation2 + $0x530] sm:$0xff]
    %v277 = vld [vmem:[#allocation2 + $0x538] sm:$0xff]
    %v278 = vld [vmem:[#allocation2 + $0x540] sm:$0xff]
    %v279 = vld [vmem:[#allocation2 + $0x548] sm:$0xff]
    %v280 = vld [vmem:[#allocation2 + $0x550] sm:$0xff]
    %v281 = vld [vmem:[#allocation2 + $0x558] sm:$0xff]
    %v282 = vld [vmem:[#allocation2 + $0x560] sm:$0xff]
    %v283 = vld [vmem:[#allocation2 + $0x568] sm:$0xff]
    %v284 = vld [vmem:[#allocation2 + $0x570] sm:$0xff]
    %v285 = vld [vmem:[#allocation2 + $0x578] sm:$0xff]
    %v286 = vld [vmem:[#allocation2 + $0x580] sm:$0xff]
    %v287 = vld [vmem:[#allocation2 + $0x588] sm:$0xff]
    %v288 = vld [vmem:[#allocation2 + $0x590] sm:$0xff]
    %v289 = vld [vmem:[#allocation2 + $0x598] sm:$0xff]
    %v290 = vld [vmem:[#allocation2 + $0x5a0] sm:$0xff]
    %v291 = vld [vmem:[#allocation2 + $0x5a8] sm:$0xff]
    %v292 = vld [vmem:[#allocation2 + $0x5b0] sm:$0xff]
    %v293 = vld [vmem:[#allocation2 + $0x5b8] sm:$0xff]
    %v294 = vld [vmem:[#allocation2 + $0x5c0] sm:$0xff]
    %v295 = vld [vmem:[#allocation2 + $0x5c8] sm:$0xff]
    %v296 = vld [vmem:[#allocation2 + $0x5d0] sm:$0xff]
    %v297 = vld [vmem:[#allocation2 + $0x5d8] sm:$0xff]
    %v298 = vld [vmem:[#allocation2 + $0x5e0] sm:$0xff]
    %v299 = vld [vmem:[#allocation2 + $0x5e8] sm:$0xff]
    %v300 = vld [vmem:[#allocation2 + $0x5f0] sm:$0xff]
    %v301 = vld [vmem:[#allocation2 + $0x5f8] sm:$0xff]
    %v302 = vld [vmem:[#allocation2 + $0x600] sm:$0xff]
    %v303 = vld [vmem:[#allocation2 + $0x608] sm:$0xff]
    %v304 = vld [vmem:[#allocation2 + $0x610] sm:$0xff]
    %v305 = vld [vmem:[#allocation2 + $0x618] sm:$0xff]
    %v306 = vld [vmem:[#allocation2 + $0x620] sm:$0xff]
    %v307 = vld [vmem:[#allocation2 + $0x628] sm:$0xff]
    %v308 = vld [vmem:[#allocation2 + $0x630] sm:$0xff]
    %v309 = vld [vmem:[#allocation2 + $0x638] sm:$0xff]
    %v310 = vld [vmem:[#allocation2 + $0x640] sm:$0xff]
    %v311 = vld [vmem:[#allocation2 + $0x648] sm:$0xff]
    %v312 = vld [vmem:[#allocation2 + $0x650] sm:$0xff]
    %v313 = vld [vmem:[#allocation2 + $0x658] sm:$0xff]
    %v314 = vld [vmem:[#allocation2 + $0x660] sm:$0xff]
    %v315 = vld [vmem:[#allocation2 + $0x668] sm:$0xff]
    %v316 = vld [vmem:[#allocation2 + $0x670] sm:$0xff]
    %v317 = vld [vmem:[#allocation2 + $0x678] sm:$0xff]
    %v318 = vld [vmem:[#allocation2 + $0x680] sm:$0xff]
    %v319 = vld [vmem:[#allocation2 + $0x688] sm:$0xff]
    %v320 = vld [vmem:[#allocation2 + $0x690] sm:$0xff]
    %v321 = vld [vmem:[#allocation2 + $0x698] sm:$0xff]
    %v322 = vld [vmem:[#allocation2 + $0x6a0] sm:$0xff]
    %v323 = vld [vmem:[#allocation2 + $0x6a8] sm:$0xff]
    %v324 = vld [vmem:[#allocation2 + $0x6b0] sm:$0xff]
    %v325 = vld [vmem:[#allocation2 + $0x6b8] sm:$0xff]
    %v326 = vld [vmem:[#allocation2 + $0x6c0] sm:$0xff]
    %v327 = vld [vmem:[#allocation2 + $0x6c8] sm:$0xff]
    %v328 = vld [vmem:[#allocation2 + $0x6d0] sm:$0xff]
    %v329 = vld [vmem:[#allocation2 + $0x6d8] sm:$0xff]
    %v330 = vld [vmem:[#allocation2 + $0x6e0] sm:$0xff]
    %v331 = vld [vmem:[#allocation2 + $0x6e8] sm:$0xff]
    %v332 = vld [vmem:[#allocation2 + $0x6f0] sm:$0xff]
    %v333 = vld [vmem:[#allocation2 + $0x6f8] sm:$0xff]
    %v334 = vld [vmem:[#allocation2 + $0x700] sm:$0xff]
    %v335 = vld [vmem:[#allocation2 + $0x708] sm:$0xff]
    %v336 = vld [vmem:[#allocation2 + $0x710] sm:$0xff]
    %v337 = vld [vmem:[#allocation2 + $0x718] sm:$0xff]
    %v338 = vld [vmem:[#allocation2 + $0x720] sm:$0xff]
    %v339 = vld [vmem:[#allocation2 + $0x728] sm:$0xff]
    %v340 = vld [vmem:[#allocation2 + $0x730] sm:$0xff]
    %v341 = vld [vmem:[#allocation2 + $0x738] sm:$0xff]
    %v342 = vld [vmem:[#allocation2 + $0x740] sm:$0xff]
    %v343 = vld [vmem:[#allocation2 + $0x748] sm:$0xff]
    %v344 = vld [vmem:[#allocation2 + $0x750] sm:$0xff]
    %v345 = vld [vmem:[#allocation2 + $0x758] sm:$0xff]
    %v346 = vld [vmem:[#allocation2 + $0x760] sm:$0xff]
    %v347 = vld [vmem:[#allocation2 + $0x768] sm:$0xff]
    %v348 = vld [vmem:[#allocation2 + $0x770] sm:$0xff]
    %v349 = vld [vmem:[#allocation2 + $0x778] sm:$0xff]
    %v350 = vld [vmem:[#allocation2 + $0x780] sm:$0xff]
    %v351 = vld [vmem:[#allocation2 + $0x788] sm:$0xff]
    %v352 = vld [vmem:[#allocation2 + $0x790] sm:$0xff]
    %v353 = vld [vmem:[#allocation2 + $0x798] sm:$0xff]
    %v354 = vld [vmem:[#allocation2 + $0x7a0] sm:$0xff]
    %v355 = vld [vmem:[#allocation2 + $0x7a8] sm:$0xff]
    %v356 = vld [vmem:[#allocation2 + $0x7b0] sm:$0xff]
    %v357 = vld [vmem:[#allocation2 + $0x7b8] sm:$0xff]
    %v358 = vld [vmem:[#allocation2 + $0x7c0] sm:$0xff]
    %v359 = vld [vmem:[#allocation2 + $0x7c8] sm:$0xff]
    %v360 = vld [vmem:[#allocation2 + $0x7d0] sm:$0xff]
    %v361 = vld [vmem:[#allocation2 + $0x7d8] sm:$0xff]
    %v362 = vld [vmem:[#allocation2 + $0x7e0] sm:$0xff]
    %v363 = vld [vmem:[#allocation2 + $0x7e8] sm:$0xff]
    %v364 = vld [vmem:[#allocation2 + $0x7f0] sm:$0xff]
    %v365 = vld [vmem:[#allocation2 + $0x7f8] sm:$0xff]
    %v366 = vld [vmem:[#allocation2 + $0x800] sm:$0xff]
    %v367 = vld [vmem:[#allocation2 + $0x808] sm:$0xff]
    %v368 = vld [vmem:[#allocation2 + $0x810] sm:$0xff]
    %v369 = vld [vmem:[#allocation2 + $0x818] sm:$0xff]
    %v370 = vld [vmem:[#allocation2 + $0x820] sm:$0xff]
    %v371 = vld [vmem:[#allocation2 + $0x828] sm:$0xff]
    %v372 = vld [vmem:[#allocation2 + $0x830] sm:$0xff]
    %v373 = vld [vmem:[#allocation2 + $0x838] sm:$0xff]
    %v374 = vld [vmem:[#allocation2 + $0x840] sm:$0xff]
    %v375 = vld [vmem:[#allocation2 + $0x848] sm:$0xff]
    %v376 = vld [vmem:[#allocation2 + $0x850] sm:$0xff]
    %v377 = vld [vmem:[#allocation2 + $0x858] sm:$0xff]
    %v378 = vld [vmem:[#allocation2 + $0x860] sm:$0xff]
    %v379 = vld [vmem:[#allocation2 + $0x868] sm:$0xff]
    %v380 = vld [vmem:[#allocation2 + $0x870] sm:$0xff]
    %v381 = vld [vmem:[#allocation2 + $0x878] sm:$0xff]
    %v382 = vld [vmem:[#allocation2 + $0x880] sm:$0xff]
    %v383 = vld [vmem:[#allocation2 + $0x888] sm:$0xff]
    %v384 = vld [vmem:[#allocation2 + $0x890] sm:$0xff]
    %v385 = vld [vmem:[#allocation2 + $0x898] sm:$0xff]
    %v386 = vld [vmem:[#allocation2 + $0x8a0] sm:$0xff]
    %v387 = vld [vmem:[#allocation2 + $0x8a8] sm:$0xff]
    %v388 = vld [vmem:[#allocation2 + $0x8b0] sm:$0xff]
    %v389 = vld [vmem:[#allocation2 + $0x8b8] sm:$0xff]
    %v390 = vld [vmem:[#allocation2 + $0x8c0] sm:$0xff]
    %v391 = vld [vmem:[#allocation2 + $0x8c8] sm:$0xff]
    %v392 = vld [vmem:[#allocation2 + $0x8d0] sm:$0xff]
    %v393 = vld [vmem:[#allocation2 + $0x8d8] sm:$0xff]
    %v394 = vld [vmem:[#allocation2 + $0x8e0] sm:$0xff]
    %v395 = vld [vmem:[#allocation2 + $0x8e8] sm:$0xff]
    %v396 = vld [vmem:[#allocation2 + $0x8f0] sm:$0xff]
    %v397 = vld [vmem:[#allocation2 + $0x8f8] sm:$0xff]
    %v398 = vld [vmem:[#allocation2 + $0x900] sm:$0xff]
    %v399 = vld [vmem:[#allocation2 + $0x908] sm:$0xff]
    %v400 = vld [vmem:[#allocation2 + $0x910] sm:$0xff]
    %v401 = vld [vmem:[#allocation2 + $0x918] sm:$0xff]
    %v402 = vld [vmem:[#allocation2 + $0x920] sm:$0xff]
    %v403 = vld [vmem:[#allocation2 + $0x928] sm:$0xff]
    %v404 = vld [vmem:[#allocation2 + $0x930] sm:$0xff]
    %v405 = vld [vmem:[#allocation2 + $0x938] sm:$0xff]
    %v406 = vld [vmem:[#allocation2 + $0x940] sm:$0xff]
    %v407 = vld [vmem:[#allocation2 + $0x948] sm:$0xff]
    %v408 = vld [vmem:[#allocation2 + $0x950] sm:$0xff]
    %v409 = vld [vmem:[#allocation2 + $0x958] sm:$0xff]
    %v410 = vld [vmem:[#allocation2 + $0x960] sm:$0xff]
    %v411 = vld [vmem:[#allocation2 + $0x968] sm:$0xff]
    %v412 = vld [vmem:[#allocation2 + $0x970] sm:$0xff]
    %v413 = vld [vmem:[#allocation2 + $0x978] sm:$0xff]
    %v414 = vld [vmem:[#allocation2 + $0x980] sm:$0xff]
    %v415 = vld [vmem:[#allocation2 + $0x988] sm:$0xff]
    %v416 = vld [vmem:[#allocation2 + $0x990] sm:$0xff]
    %v417 = vld [vmem:[#allocation2 + $0x998] sm:$0xff]
    %v418 = vld [vmem:[#allocation2 + $0x9a0] sm:$0xff]
    %v419 = vld [vmem:[#allocation2 + $0x9a8] sm:$0xff]
    %v420 = vld [vmem:[#allocation2 + $0x9b0] sm:$0xff]
    %v421 = vld [vmem:[#allocation2 + $0x9b8] sm:$0xff]
    %v422 = vld [vmem:[#allocation2 + $0x9c0] sm:$0xff]
    %v423 = vld [vmem:[#allocation2 + $0x9c8] sm:$0xff]
    %v424 = vld [vmem:[#allocation2 + $0x9d0] sm:$0xff]
    %v425 = vld [vmem:[#allocation2 + $0x9d8] sm:$0xff]
    %v426 = vld [vmem:[#allocation2 + $0x9e0] sm:$0xff]
    %v427 = vld [vmem:[#allocation2 + $0x9e8] sm:$0xff]
    %v428 = vld [vmem:[#allocation2 + $0x9f0] sm:$0xff]
    %v429 = vld [vmem:[#allocation2 + $0x9f8] sm:$0xff]
    %v430 = vld [vmem:[#allocation2 + $0xa00] sm:$0xff]
    %v431 = vld [vmem:[#allocation2 + $0xa08] sm:$0xff]
    %v432 = vld [vmem:[#allocation2 + $0xa10] sm:$0xff]
    %v433 = vld [vmem:[#allocation2 + $0xa18] sm:$0xff]
    %v434 = vld [vmem:[#allocation2 + $0xa20] sm:$0xff]
    %v435 = vld [vmem:[#allocation2 + $0xa28] sm:$0xff]
    %v436 = vld [vmem:[#allocation2 + $0xa30] sm:$0xff]
    %v437 = vld [vmem:[#allocation2 + $0xa38] sm:$0xff]
    %v438 = vld [vmem:[#allocation2 + $0xa40] sm:$0xff]
    %v439 = vld [vmem:[#allocation2 + $0xa48] sm:$0xff]
    %v440 = vld [vmem:[#allocation2 + $0xa50] sm:$0xff]
    %v441 = vld [vmem:[#allocation2 + $0xa58] sm:$0xff]
    %v442 = vld [vmem:[#allocation2 + $0xa60] sm:$0xff]
    %v443 = vld [vmem:[#allocation2 + $0xa68] sm:$0xff]
    %v444 = vld [vmem:[#allocation2 + $0xa70] sm:$0xff]
    %v445 = vld [vmem:[#allocation2 + $0xa78] sm:$0xff]
    %v446 = vld [vmem:[#allocation2 + $0xa80] sm:$0xff]
    %v447 = vld [vmem:[#allocation2 + $0xa88] sm:$0xff]
    %v448 = vld [vmem:[#allocation2 + $0xa90] sm:$0xff]
    %v449 = vld [vmem:[#allocation2 + $0xa98] sm:$0xff]
    %v450 = vld [vmem:[#allocation2 + $0xaa0] sm:$0xff]
    %v451 = vld [vmem:[#allocation2 + $0xaa8] sm:$0xff]
    %v452 = vld [vmem:[#allocation2 + $0xab0] sm:$0xff]
    %v453 = vld [vmem:[#allocation2 + $0xab8] sm:$0xff]
    %v454 = vld [vmem:[#allocation2 + $0xac0] sm:$0xff]
    %v455 = vld [vmem:[#allocation2 + $0xac8] sm:$0xff]
    %v456 = vld [vmem:[#allocation2 + $0xad0] sm:$0xff]
    %v457 = vld [vmem:[#allocation2 + $0xad8] sm:$0xff]
    %v458 = vld [vmem:[#allocation2 + $0xae0] sm:$0xff]
    %v459 = vld [vmem:[#allocation2 + $0xae8] sm:$0xff]
    %v460 = vld [vmem:[#allocation2 + $0xaf0] sm:$0xff]
    %v461 = vld [vmem:[#allocation2 + $0xaf8] sm:$0xff]
    %v462 = vld [vmem:[#allocation2 + $0xb00] sm:$0xff]
    %v463 = vld [vmem:[#allocation2 + $0xb08] sm:$0xff]
    %v464 = vld [vmem:[#allocation2 + $0xb10] sm:$0xff]
    %v465 = vld [vmem:[#allocation2 + $0xb18] sm:$0xff]
    %v466 = vld [vmem:[#allocation2 + $0xb20] sm:$0xff]
    %v467 = vld [vmem:[#allocation2 + $0xb28] sm:$0xff]
    %v468 = vld [vmem:[#allocation2 + $0xb30] sm:$0xff]
    %v469 = vld [vmem:[#allocation2 + $0xb38] sm:$0xff]
    %v470 = vld [vmem:[#allocation2 + $0xb40] sm:$0xff]
    %v471 = vld [vmem:[#allocation2 + $0xb48] sm:$0xff]
    %v472 = vld [vmem:[#allocation2 + $0xb50] sm:$0xff]
    %v473 = vld [vmem:[#allocation2 + $0xb58] sm:$0xff]
    %v474 = vld [vmem:[#allocation2 + $0xb60] sm:$0xff]
    %v475 = vld [vmem:[#allocation2 + $0xb68] sm:$0xff]
    %v476 = vld [vmem:[#allocation2 + $0xb70] sm:$0xff]
    %v477 = vld [vmem:[#allocation2 + $0xb78] sm:$0xff]
    %v478 = vld [vmem:[#allocation2 + $0xb80] sm:$0xff]
    %v479 = vld [vmem:[#allocation2 + $0xb88] sm:$0xff]
    %v480 = vld [vmem:[#allocation2 + $0xb90] sm:$0xff]
    %v481 = vld [vmem:[#allocation2 + $0xb98] sm:$0xff]
    %v482 = vld [vmem:[#allocation2 + $0xba0] sm:$0xff]
    %v483 = vld [vmem:[#allocation2 + $0xba8] sm:$0xff]
    %v484 = vld [vmem:[#allocation2 + $0xbb0] sm:$0xff]
    %v485 = vld [vmem:[#allocation2 + $0xbb8] sm:$0xff]
    %v486 = vld [vmem:[#allocation2 + $0xbc0] sm:$0xff]
    %v487 = vld [vmem:[#allocation2 + $0xbc8] sm:$0xff]
    %v488 = vld [vmem:[#allocation2 + $0xbd0] sm:$0xff]
    %v489 = vld [vmem:[#allocation2 + $0xbd8] sm:$0xff]
    %v490 = vld [vmem:[#allocation2 + $0xbe0] sm:$0xff]
    %v491 = vld [vmem:[#allocation2 + $0xbe8] sm:$0xff]
    %v492 = vld [vmem:[#allocation2 + $0xbf0] sm:$0xff]
    %v493 = vld [vmem:[#allocation2 + $0xbf8] sm:$0xff]
    %v494 = vld [vmem:[#allocation4] sm:$0x7]
    %v496 = vlaneseq
    %v497 = vshrl.u32 %v496, 7
    %v498 = vsub.s32 0, %v497
    %v499 = vrot.slane %v494, %v498
    %v500 = vlaneseq
    %v501 = vshrl.u32 %v500, 7
    %v502 = vsub.s32 1, %v501
    %v503 = vrot.slane %v494, %v502
    %v504 = vlaneseq
    %v505 = vshrl.u32 %v504, 7
    %v506 = vsub.s32 2, %v505
    %v507 = vrot.slane %v494, %v506
    %511 = vmatprep.subr.mxu0 %v111
    %512 = vmatpush1.msra.mxu0 %v110
    %513 = vmatprep.subr.mxu0 %v114
    %514 = vmatpush1.msra.mxu0 %v113
    %515 = vmatprep.subr.mxu0 %v117
    %516 = vmatpush1.msra.mxu0 %v116
    %517 = vmatprep.subr.mxu0 %v120
    %518 = vmatpush1.msra.mxu0 %v119
    %519 = vmatprep.subr.mxu0 %v123
    %520 = vmatpush1.msra.mxu0 %v122
    %521 = vmatprep.subr.mxu0 %v126
    %522 = vmatpush1.msra.mxu0 %v125
    %523 = vmatprep.subr.mxu0 %v129
    %524 = vmatpush1.msra.mxu0 %v128
    %525 = vmatprep.subr.mxu0 %v132
    %526 = vmatpush1.msra.mxu0 %v131
    %527 = vmatprep.subr.mxu0 %v135
    %528 = vmatpush1.msra.mxu0 %v134
    %529 = vmatprep.subr.mxu0 %v138
    %530 = vmatpush1.msra.mxu0 %v137
    %531 = vmatprep.subr.mxu0 %v141
    %532 = vmatpush1.msra.mxu0 %v140
    %533 = vmatprep.subr.mxu0 %v144
    %534 = vmatpush1.msra.mxu0 %v143
    %535 = vmatprep.subr.mxu0 %v147
    %536 = vmatpush1.msra.mxu0 %v146
    %537 = vmatprep.subr.mxu0 %v150
    %538 = vmatpush1.msra.mxu0 %v149
    %539 = vmatprep.subr.mxu0 %v153
    %540 = vmatpush1.msra.mxu0 %v152
    %541 = vmatprep.subr.mxu0 %v156
    %542 = vmatpush1.msra.mxu0 %v155
    %543 = vmatprep.subr.mxu0 %v159
    %544 = vmatpush1.msra.mxu0 %v158
    %545 = vmatprep.subr.mxu0 %v162
    %546 = vmatpush1.msra.mxu0 %v161
    %547 = vmatprep.subr.mxu0 %v165
    %548 = vmatpush1.msra.mxu0 %v164
    %549 = vmatprep.subr.mxu0 %v168
    %550 = vmatpush1.msra.mxu0 %v167
    %551 = vmatprep.subr.mxu0 %v171
    %552 = vmatpush1.msra.mxu0 %v170
    %553 = vmatprep.subr.mxu0 %v174
    %554 = vmatpush1.msra.mxu0 %v173
    %555 = vmatprep.subr.mxu0 %v177
    %556 = vmatpush1.msra.mxu0 %v176
    %557 = vmatprep.subr.mxu0 %v180
    %558 = vmatpush1.msra.mxu0 %v179
    %559 = vmatprep.subr.mxu0 %v183
    %560 = vmatpush1.msra.mxu0 %v182
    %561 = vmatprep.subr.mxu0 %v186
    %562 = vmatpush1.msra.mxu0 %v185
    %563 = vmatprep.subr.mxu0 %v189
    %564 = vmatpush1.msra.mxu0 %v188
    %565 = vmatprep.subr.mxu0 %v192
    %566 = vmatpush1.msra.mxu0 %v191
    %567 = vmatprep.subr.mxu0 %v195
    %568 = vmatpush1.msra.mxu0 %v194
    %569 = vmatprep.subr.mxu0 %v198
    %570 = vmatpush1.msra.mxu0 %v197
    %571 = vmatprep.subr.mxu0 %v201
    %572 = vmatpush1.msra.mxu0 %v200
    %573 = vmatprep.subr.mxu0 %v204
    %574 = vmatpush1.msra.mxu0 %v203
    %575 = vmatprep.mubr.f32.mxu0 %v103
    %576 = vmatmul.mubr.f32.gmra.mrb[0].mxu0 %v102
    %v577 = vpop.f32.mrb[0].mxu0
    %v578 = vadd.f32 %v499, %v577
    %v579 = vpop.f32.mrb[0].mxu0
    %v580 = vadd.f32 %v503, %v579
    %581 = vdwg.mxu0
    %582 = vmatprep.subr.mxu0 %v207
    %583 = vmatpush1.msra.mxu0 %v206
    %584 = vmatprep.subr.mxu0 %v210
    %585 = vmatpush1.msra.mxu0 %v209
    %586 = vmatprep.subr.mxu0 %v213
    %587 = vmatpush1.msra.mxu0 %v212
    %588 = vmatprep.subr.mxu0 %v216
    %589 = vmatpush1.msra.mxu0 %v215
    %590 = vmatprep.subr.mxu0 %v219
    %591 = vmatpush1.msra.mxu0 %v218
    %592 = vmatprep.subr.mxu0 %v222
    %593 = vmatpush1.msra.mxu0 %v221
    %594 = vmatprep.subr.mxu0 %v225
    %595 = vmatpush1.msra.mxu0 %v224
    %596 = vmatprep.subr.mxu0 %v228
    %597 = vmatpush1.msra.mxu0 %v227
    %598 = vmatprep.subr.mxu0 %v231
    %599 = vmatpush1.msra.mxu0 %v230
    %600 = vmatprep.subr.mxu0 %v234
    %601 = vmatpush1.msra.mxu0 %v233
    %602 = vmatprep.subr.mxu0 %v237
    %603 = vmatpush1.msra.mxu0 %v236
    %604 = vmatprep.subr.mxu0 %v240
    %605 = vmatpush1.msra.mxu0 %v239
    %606 = vmatprep.subr.mxu0 %v243
    %607 = vmatpush1.msra.mxu0 %v242
    %608 = vmatprep.subr.mxu0 %v246
    %609 = vmatpush1.msra.mxu0 %v245
    %610 = vmatprep.subr.mxu0 %v249
    %611 = vmatpush1.msra.mxu0 %v248
    %612 = vmatprep.subr.mxu0 %v252
    %613 = vmatpush1.msra.mxu0 %v251
    %614 = vmatprep.subr.mxu0 %v255
    %615 = vmatpush1.msra.mxu0 %v254
    %616 = vmatprep.subr.mxu0 %v258
    %617 = vmatpush1.msra.mxu0 %v257
    %618 = vmatprep.subr.mxu0 %v261
    %619 = vmatpush1.msra.mxu0 %v260
    %620 = vmatprep.subr.mxu0 %v264
    %621 = vmatpush1.msra.mxu0 %v263
    %622 = vmatprep.subr.mxu0 %v267
    %623 = vmatpush1.msra.mxu0 %v266
    %624 = vmatprep.subr.mxu0 %v270
    %625 = vmatpush1.msra.mxu0 %v269
    %626 = vmatprep.subr.mxu0 %v273
    %627 = vmatpush1.msra.mxu0 %v272
    %628 = vmatprep.subr.mxu0 %v276
    %629 = vmatpush1.msra.mxu0 %v275
    %630 = vmatprep.subr.mxu0 %v279
    %631 = vmatpush1.msra.mxu0 %v278
    %632 = vmatprep.subr.mxu0 %v282
    %633 = vmatpush1.msra.mxu0 %v281
    %634 = vmatprep.subr.mxu0 %v285
    %635 = vmatpush1.msra.mxu0 %v284
    %636 = vmatprep.subr.mxu0 %v288
    %637 = vmatpush1.msra.mxu0 %v287
    %638 = vmatprep.subr.mxu0 %v291
    %639 = vmatpush1.msra.mxu0 %v290
    %640 = vmatprep.subr.mxu0 %v294
    %641 = vmatpush1.msra.mxu0 %v293
    %642 = vmatprep.subr.mxu0 %v297
    %643 = vmatpush1.msra.mxu0 %v296
    %644 = vmatprep.subr.mxu0 %v300
    %645 = vmatpush1.msra.mxu0 %v299
    %646 = vmatprep.mubr.f32.mxu0 %v105
    %647 = vmatmul.mubr.f32.gmra.mrb[0].mxu0 %v104
    %v648 = vpop.f32.mrb[0].mxu0
    %v649 = vadd.f32 %v578, %v648
    %v650 = vpop.f32.mrb[0].mxu0
    %v651 = vadd.f32 %v580, %v650
    %652 = vdwg.mxu0
    %653 = vmatprep.subr.mxu0 %v303
    %654 = vmatpush1.msra.mxu0 %v302
    %655 = vmatprep.subr.mxu0 %v306
    %656 = vmatpush1.msra.mxu0 %v305
    %657 = vmatprep.subr.mxu0 %v309
    %658 = vmatpush1.msra.mxu0 %v308
    %659 = vmatprep.subr.mxu0 %v312
    %660 = vmatpush1.msra.mxu0 %v311
    %661 = vmatprep.subr.mxu0 %v315
    %662 = vmatpush1.msra.mxu0 %v314
    %663 = vmatprep.subr.mxu0 %v318
    %664 = vmatpush1.msra.mxu0 %v317
    %665 = vmatprep.subr.mxu0 %v321
    %666 = vmatpush1.msra.mxu0 %v320
    %667 = vmatprep.subr.mxu0 %v324
    %668 = vmatpush1.msra.mxu0 %v323
    %669 = vmatprep.subr.mxu0 %v327
    %670 = vmatpush1.msra.mxu0 %v326
    %671 = vmatprep.subr.mxu0 %v330
    %672 = vmatpush1.msra.mxu0 %v329
    %673 = vmatprep.subr.mxu0 %v333
    %674 = vmatpush1.msra.mxu0 %v332
    %675 = vmatprep.subr.mxu0 %v336
    %676 = vmatpush1.msra.mxu0 %v335
    %677 = vmatprep.subr.mxu0 %v339
    %678 = vmatpush1.msra.mxu0 %v338
    %679 = vmatprep.subr.mxu0 %v342
    %680 = vmatpush1.msra.mxu0 %v341
    %681 = vmatprep.subr.mxu0 %v345
    %682 = vmatpush1.msra.mxu0 %v344
    %683 = vmatprep.subr.mxu0 %v348
    %684 = vmatpush1.msra.mxu0 %v347
    %685 = vmatprep.subr.mxu0 %v351
    %686 = vmatpush1.msra.mxu0 %v350
    %687 = vmatprep.subr.mxu0 %v354
    %688 = vmatpush1.msra.mxu0 %v353
    %689 = vmatprep.subr.mxu0 %v357
    %690 = vmatpush1.msra.mxu0 %v356
    %691 = vmatprep.subr.mxu0 %v360
    %692 = vmatpush1.msra.mxu0 %v359
    %693 = vmatprep.subr.mxu0 %v363
    %694 = vmatpush1.msra.mxu0 %v362
    %695 = vmatprep.subr.mxu0 %v366
    %696 = vmatpush1.msra.mxu0 %v365
    %697 = vmatprep.subr.mxu0 %v369
    %698 = vmatpush1.msra.mxu0 %v368
    %699 = vmatprep.subr.mxu0 %v372
    %700 = vmatpush1.msra.mxu0 %v371
    %701 = vmatprep.subr.mxu0 %v375
    %702 = vmatpush1.msra.mxu0 %v374
    %703 = vmatprep.subr.mxu0 %v378
    %704 = vmatpush1.msra.mxu0 %v377
    %705 = vmatprep.subr.mxu0 %v381
    %706 = vmatpush1.msra.mxu0 %v380
    %707 = vmatprep.subr.mxu0 %v384
    %708 = vmatpush1.msra.mxu0 %v383
    %709 = vmatprep.subr.mxu0 %v387
    %710 = vmatpush1.msra.mxu0 %v386
    %711 = vmatprep.subr.mxu0 %v390
    %712 = vmatpush1.msra.mxu0 %v389
    %713 = vmatprep.subr.mxu0 %v393
    %714 = vmatpush1.msra.mxu0 %v392
    %715 = vmatprep.subr.mxu0 %v396
    %716 = vmatpush1.msra.mxu0 %v395
    %717 = vmatprep.mubr.f32.mxu0 %v107
    %718 = vmatmul.mubr.f32.gmra.mrb[0].mxu0 %v106
    %v719 = vpop.f32.mrb[0].mxu0
    %v720 = vadd.f32 %v649, %v719
    %v721 = vpop.f32.mrb[0].mxu0
    %v722 = vadd.f32 %v651, %v721
    %723 = vdwg.mxu0
    %724 = vmatprep.subr.mxu0 %v399
    %725 = vmatpush1.msra.mxu0 %v398
    %726 = vmatprep.subr.mxu0 %v402
    %727 = vmatpush1.msra.mxu0 %v401
    %728 = vmatprep.subr.mxu0 %v405
    %729 = vmatpush1.msra.mxu0 %v404
    %730 = vmatprep.subr.mxu0 %v408
    %731 = vmatpush1.msra.mxu0 %v407
    %732 = vmatprep.subr.mxu0 %v411
    %733 = vmatpush1.msra.mxu0 %v410
    %734 = vmatprep.subr.mxu0 %v414
    %735 = vmatpush1.msra.mxu0 %v413
    %736 = vmatprep.subr.mxu0 %v417
    %737 = vmatpush1.msra.mxu0 %v416
    %738 = vmatprep.subr.mxu0 %v420
    %739 = vmatpush1.msra.mxu0 %v419
    %740 = vmatprep.subr.mxu0 %v423
    %741 = vmatpush1.msra.mxu0 %v422
    %742 = vmatprep.subr.mxu0 %v426
    %743 = vmatpush1.msra.mxu0 %v425
    %744 = vmatprep.subr.mxu0 %v429
    %745 = vmatpush1.msra.mxu0 %v428
    %746 = vmatprep.subr.mxu0 %v432
    %747 = vmatpush1.msra.mxu0 %v431
    %748 = vmatprep.subr.mxu0 %v435
    %749 = vmatpush1.msra.mxu0 %v434
    %750 = vmatprep.subr.mxu0 %v438
    %751 = vmatpush1.msra.mxu0 %v437
    %752 = vmatprep.subr.mxu0 %v441
    %753 = vmatpush1.msra.mxu0 %v440
    %754 = vmatprep.subr.mxu0 %v444
    %755 = vmatpush1.msra.mxu0 %v443
    %756 = vmatprep.subr.mxu0 %v447
    %757 = vmatpush1.msra.mxu0 %v446
    %758 = vmatprep.subr.mxu0 %v450
    %759 = vmatpush1.msra.mxu0 %v449
    %760 = vmatprep.subr.mxu0 %v453
    %761 = vmatpush1.msra.mxu0 %v452
    %762 = vmatprep.subr.mxu0 %v456
    %763 = vmatpush1.msra.mxu0 %v455
    %764 = vmatprep.subr.mxu0 %v459
    %765 = vmatpush1.msra.mxu0 %v458
    %766 = vmatprep.subr.mxu0 %v462
    %767 = vmatpush1.msra.mxu0 %v461
    %768 = vmatprep.subr.mxu0 %v465
    %769 = vmatpush1.msra.mxu0 %v464
    %770 = vmatprep.subr.mxu0 %v468
    %771 = vmatpush1.msra.mxu0 %v467
    %772 = vmatprep.subr.mxu0 %v471
    %773 = vmatpush1.msra.mxu0 %v470
    %774 = vmatprep.subr.mxu0 %v474
    %775 = vmatpush1.msra.mxu0 %v473
    %776 = vmatprep.subr.mxu0 %v477
    %777 = vmatpush1.msra.mxu0 %v476
    %778 = vmatprep.subr.mxu0 %v480
    %779 = vmatpush1.msra.mxu0 %v479
    %780 = vmatprep.subr.mxu0 %v483
    %781 = vmatpush1.msra.mxu0 %v482
    %782 = vmatprep.subr.mxu0 %v486
    %783 = vmatpush1.msra.mxu0 %v485
    %784 = vmatprep.subr.mxu0 %v489
    %785 = vmatpush1.msra.mxu0 %v488
    %786 = vmatprep.subr.mxu0 %v492
    %787 = vmatpush1.msra.mxu0 %v491
    %788 = vmatprep.mubr.f32.mxu0 %v109
    %789 = vmatmul.mubr.f32.gmra.mrb[0].mxu0 %v108
    %v790 = vpop.f32.mrb[0].mxu0
    %v791 = vadd.f32 %v720, %v790
    %v792 = vpop.f32.mrb[0].mxu0
    %v793 = vadd.f32 %v722, %v792
    %794 = vdwg.mxu0
    %795 = vmatprep.subr.mxu0 0.0
    %796 = vmatpush1.msra.mxu0 %v112
    %797 = vmatprep.subr.mxu0 0.0
    %798 = vmatpush1.msra.mxu0 %v115
    %799 = vmatprep.subr.mxu0 0.0
    %800 = vmatpush1.msra.mxu0 %v118
    %801 = vmatprep.subr.mxu0 0.0
    %802 = vmatpush1.msra.mxu0 %v121
    %803 = vmatprep.subr.mxu0 0.0
    %804 = vmatpush1.msra.mxu0 %v124
    %805 = vmatprep.subr.mxu0 0.0
    %806 = vmatpush1.msra.mxu0 %v127
    %807 = vmatprep.subr.mxu0 0.0
    %808 = vmatpush1.msra.mxu0 %v130
    %809 = vmatprep.subr.mxu0 0.0
    %810 = vmatpush1.msra.mxu0 %v133
    %811 = vmatprep.subr.mxu0 0.0
    %812 = vmatpush1.msra.mxu0 %v136
    %813 = vmatprep.subr.mxu0 0.0
    %814 = vmatpush1.msra.mxu0 %v139
    %815 = vmatprep.subr.mxu0 0.0
    %816 = vmatpush1.msra.mxu0 %v142
    %817 = vmatprep.subr.mxu0 0.0
    %818 = vmatpush1.msra.mxu0 %v145
    %819 = vmatprep.subr.mxu0 0.0
    %820 = vmatpush1.msra.mxu0 %v148
    %821 = vmatprep.subr.mxu0 0.0
    %822 = vmatpush1.msra.mxu0 %v151
    %823 = vmatprep.subr.mxu0 0.0
    %824 = vmatpush1.msra.mxu0 %v154
    %825 = vmatprep.subr.mxu0 0.0
    %826 = vmatpush1.msra.mxu0 %v157
    %827 = vmatprep.subr.mxu0 0.0
    %828 = vmatpush1.msra.mxu0 %v160
    %829 = vmatprep.subr.mxu0 0.0
    %830 = vmatpush1.msra.mxu0 %v163
    %831 = vmatprep.subr.mxu0 0.0
    %832 = vmatpush1.msra.mxu0 %v166
    %833 = vmatprep.subr.mxu0 0.0
    %834 = vmatpush1.msra.mxu0 %v169
    %835 = vmatprep.subr.mxu0 0.0
    %836 = vmatpush1.msra.mxu0 %v172
    %837 = vmatprep.subr.mxu0 0.0
    %838 = vmatpush1.msra.mxu0 %v175
    %839 = vmatprep.subr.mxu0 0.0
    %840 = vmatpush1.msra.mxu0 %v178
    %841 = vmatprep.subr.mxu0 0.0
    %842 = vmatpush1.msra.mxu0 %v181
    %843 = vmatprep.subr.mxu0 0.0
    %844 = vmatpush1.msra.mxu0 %v184
    %845 = vmatprep.subr.mxu0 0.0
    %846 = vmatpush1.msra.mxu0 %v187
    %847 = vmatprep.subr.mxu0 0.0
    %848 = vmatpush1.msra.mxu0 %v190
    %849 = vmatprep.subr.mxu0 0.0
    %850 = vmatpush1.msra.mxu0 %v193
    %851 = vmatprep.subr.mxu0 0.0
    %852 = vmatpush1.msra.mxu0 %v196
    %853 = vmatprep.subr.mxu0 0.0
    %854 = vmatpush1.msra.mxu0 %v199
    %855 = vmatprep.subr.mxu0 0.0
    %856 = vmatpush1.msra.mxu0 %v202
    %857 = vmatprep.subr.mxu0 0.0
    %858 = vmatpush1.msra.mxu0 %v205
    %859 = vmatprep.mubr.f32.mxu0 %v103
    %860 = vmatmul.mubr.f32.gmra.mrb[0].mxu0 %v102
    %v861 = vpop.f32.mrb[0].mxu0
    %v862 = vadd.f32 %v507, %v861
    %v863 = vpop.f32.mrb[0].mxu0
    %864 = vdwg.mxu0
    %865 = vmatprep.subr.mxu0 0.0
    %866 = vmatpush1.msra.mxu0 %v208
    %867 = vmatprep.subr.mxu0 0.0
    %868 = vmatpush1.msra.mxu0 %v211
    %869 = vmatprep.subr.mxu0 0.0
    %870 = vmatpush1.msra.mxu0 %v214
    %871 = vmatprep.subr.mxu0 0.0
    %872 = vmatpush1.msra.mxu0 %v217
    %873 = vmatprep.subr.mxu0 0.0
    %874 = vmatpush1.msra.mxu0 %v220
    %875 = vmatprep.subr.mxu0 0.0
    %876 = vmatpush1.msra.mxu0 %v223
    %877 = vmatprep.subr.mxu0 0.0
    %878 = vmatpush1.msra.mxu0 %v226
    %879 = vmatprep.subr.mxu0 0.0
    %880 = vmatpush1.msra.mxu0 %v229
    %881 = vmatprep.subr.mxu0 0.0
    %882 = vmatpush1.msra.mxu0 %v232
    %883 = vmatprep.subr.mxu0 0.0
    %884 = vmatpush1.msra.mxu0 %v235
    %885 = vmatprep.subr.mxu0 0.0
    %886 = vmatpush1.msra.mxu0 %v238
    %887 = vmatprep.subr.mxu0 0.0
    %888 = vmatpush1.msra.mxu0 %v241
    %889 = vmatprep.subr.mxu0 0.0
    %890 = vmatpush1.msra.mxu0 %v244
    %891 = vmatprep.subr.mxu0 0.0
    %892 = vmatpush1.msra.mxu0 %v247
    %893 = vmatprep.subr.mxu0 0.0
    %894 = vmatpush1.msra.mxu0 %v250
    %895 = vmatprep.subr.mxu0 0.0
    %896 = vmatpush1.msra.mxu0 %v253
    %897 = vmatprep.subr.mxu0 0.0
    %898 = vmatpush1.msra.mxu0 %v256
    %899 = vmatprep.subr.mxu0 0.0
    %900 = vmatpush1.msra.mxu0 %v259
    %901 = vmatprep.subr.mxu0 0.0
    %902 = vmatpush1.msra.mxu0 %v262
    %903 = vmatprep.subr.mxu0 0.0
    %904 = vmatpush1.msra.mxu0 %v265
    %905 = vmatprep.subr.mxu0 0.0
    %906 = vmatpush1.msra.mxu0 %v268
    %907 = vmatprep.subr.mxu0 0.0
    %908 = vmatpush1.msra.mxu0 %v271
    %909 = vmatprep.subr.mxu0 0.0
    %910 = vmatpush1.msra.mxu0 %v274
    %911 = vmatprep.subr.mxu0 0.0
    %912 = vmatpush1.msra.mxu0 %v277
    %913 = vmatprep.subr.mxu0 0.0
    %914 = vmatpush1.msra.mxu0 %v280
    %915 = vmatprep.subr.mxu0 0.0
    %916 = vmatpush1.msra.mxu0 %v283
    %917 = vmatprep.subr.mxu0 0.0
    %918 = vmatpush1.msra.mxu0 %v286
    %919 = vmatprep.subr.mxu0 0.0
    %920 = vmatpush1.msra.mxu0 %v289
    %921 = vmatprep.subr.mxu0 0.0
    %922 = vmatpush1.msra.mxu0 %v292
    %923 = vmatprep.subr.mxu0 0.0
    %924 = vmatpush1.msra.mxu0 %v295
    %925 = vmatprep.subr.mxu0 0.0
    %926 = vmatpush1.msra.mxu0 %v298
    %927 = vmatprep.subr.mxu0 0.0
    %928 = vmatpush1.msra.mxu0 %v301
    %929 = vmatprep.mubr.f32.mxu0 %v105
    %930 = vmatmul.mubr.f32.gmra.mrb[0].mxu0 %v104
    %v931 = vpop.f32.mrb[0].mxu0
    %v932 = vadd.f32 %v862, %v931
    %v933 = vpop.f32.mrb[0].mxu0
    %934 = vdwg.mxu0
    %935 = vmatprep.subr.mxu0 0.0
    %936 = vmatpush1.msra.mxu0 %v304
    %937 = vmatprep.subr.mxu0 0.0
    %938 = vmatpush1.msra.mxu0 %v307
    %939 = vmatprep.subr.mxu0 0.0
    %940 = vmatpush1.msra.mxu0 %v310
    %941 = vmatprep.subr.mxu0 0.0
    %942 = vmatpush1.msra.mxu0 %v313
    %943 = vmatprep.subr.mxu0 0.0
    %944 = vmatpush1.msra.mxu0 %v316
    %945 = vmatprep.subr.mxu0 0.0
    %946 = vmatpush1.msra.mxu0 %v319
    %947 = vmatprep.subr.mxu0 0.0
    %948 = vmatpush1.msra.mxu0 %v322
    %949 = vmatprep.subr.mxu0 0.0
    %950 = vmatpush1.msra.mxu0 %v325
    %951 = vmatprep.subr.mxu0 0.0
    %952 = vmatpush1.msra.mxu0 %v328
    %953 = vmatprep.subr.mxu0 0.0
    %954 = vmatpush1.msra.mxu0 %v331
    %955 = vmatprep.subr.mxu0 0.0
    %956 = vmatpush1.msra.mxu0 %v334
    %957 = vmatprep.subr.mxu0 0.0
    %958 = vmatpush1.msra.mxu0 %v337
    %959 = vmatprep.subr.mxu0 0.0
    %960 = vmatpush1.msra.mxu0 %v340
    %961 = vmatprep.subr.mxu0 0.0
    %962 = vmatpush1.msra.mxu0 %v343
    %963 = vmatprep.subr.mxu0 0.0
    %964 = vmatpush1.msra.mxu0 %v346
    %965 = vmatprep.subr.mxu0 0.0
    %966 = vmatpush1.msra.mxu0 %v349
    %967 = vmatprep.subr.mxu0 0.0
    %968 = vmatpush1.msra.mxu0 %v352
    %969 = vmatprep.subr.mxu0 0.0
    %970 = vmatpush1.msra.mxu0 %v355
    %971 = vmatprep.subr.mxu0 0.0
    %972 = vmatpush1.msra.mxu0 %v358
    %973 = vmatprep.subr.mxu0 0.0
    %974 = vmatpush1.msra.mxu0 %v361
    %975 = vmatprep.subr.mxu0 0.0
    %976 = vmatpush1.msra.mxu0 %v364
    %977 = vmatprep.subr.mxu0 0.0
    %978 = vmatpush1.msra.mxu0 %v367
    %979 = vmatprep.subr.mxu0 0.0
    %980 = vmatpush1.msra.mxu0 %v370
    %981 = vmatprep.subr.mxu0 0.0
    %982 = vmatpush1.msra.mxu0 %v373
    %983 = vmatprep.subr.mxu0 0.0
    %984 = vmatpush1.msra.mxu0 %v376
    %985 = vmatprep.subr.mxu0 0.0
    %986 = vmatpush1.msra.mxu0 %v379
    %987 = vmatprep.subr.mxu0 0.0
    %988 = vmatpush1.msra.mxu0 %v382
    %989 = vmatprep.subr.mxu0 0.0
    %990 = vmatpush1.msra.mxu0 %v385
    %991 = vmatprep.subr.mxu0 0.0
    %992 = vmatpush1.msra.mxu0 %v388
    %993 = vmatprep.subr.mxu0 0.0
    %994 = vmatpush1.msra.mxu0 %v391
    %995 = vmatprep.subr.mxu0 0.0
    %996 = vmatpush1.msra.mxu0 %v394
    %997 = vmatprep.subr.mxu0 0.0
    %998 = vmatpush1.msra.mxu0 %v397
    %999 = vmatprep.mubr.f32.mxu0 %v107
    %1000 = vmatmul.mubr.f32.gmra.mrb[0].mxu0 %v106
    %v1001 = vpop.f32.mrb[0].mxu0
    %v1002 = vadd.f32 %v932, %v1001
    %v1003 = vpop.f32.mrb[0].mxu0
    %1004 = vdwg.mxu0
    %1005 = vmatprep.subr.mxu0 0.0
    %1006 = vmatpush1.msra.mxu0 %v400
    %1007 = vmatprep.subr.mxu0 0.0
    %1008 = vmatpush1.msra.mxu0 %v403
    %1009 = vmatprep.subr.mxu0 0.0
    %1010 = vmatpush1.msra.mxu0 %v406
    %1011 = vmatprep.subr.mxu0 0.0
    %1012 = vmatpush1.msra.mxu0 %v409
    %1013 = vmatprep.subr.mxu0 0.0
    %1014 = vmatpush1.msra.mxu0 %v412
    %1015 = vmatprep.subr.mxu0 0.0
    %1016 = vmatpush1.msra.mxu0 %v415
    %1017 = vmatprep.subr.mxu0 0.0
    %1018 = vmatpush1.msra.mxu0 %v418
    %1019 = vmatprep.subr.mxu0 0.0
    %1020 = vmatpush1.msra.mxu0 %v421
    %1021 = vmatprep.subr.mxu0 0.0
    %1022 = vmatpush1.msra.mxu0 %v424
    %1023 = vmatprep.subr.mxu0 0.0
    %1024 = vmatpush1.msra.mxu0 %v427
    %1025 = vmatprep.subr.mxu0 0.0
    %1026 = vmatpush1.msra.mxu0 %v430
    %1027 = vmatprep.subr.mxu0 0.0
    %1028 = vmatpush1.msra.mxu0 %v433
    %1029 = vmatprep.subr.mxu0 0.0
    %1030 = vmatpush1.msra.mxu0 %v436
    %1031 = vmatprep.subr.mxu0 0.0
    %1032 = vmatpush1.msra.mxu0 %v439
    %1033 = vmatprep.subr.mxu0 0.0
    %1034 = vmatpush1.msra.mxu0 %v442
    %1035 = vmatprep.subr.mxu0 0.0
    %1036 = vmatpush1.msra.mxu0 %v445
    %1037 = vmatprep.subr.mxu0 0.0
    %1038 = vmatpush1.msra.mxu0 %v448
    %1039 = vmatprep.subr.mxu0 0.0
    %1040 = vmatpush1.msra.mxu0 %v451
    %1041 = vmatprep.subr.mxu0 0.0
    %1042 = vmatpush1.msra.mxu0 %v454
    %1043 = vmatprep.subr.mxu0 0.0
    %1044 = vmatpush1.msra.mxu0 %v457
    %1045 = vmatprep.subr.mxu0 0.0
    %1046 = vmatpush1.msra.mxu0 %v460
    %1047 = vmatprep.subr.mxu0 0.0
    %1048 = vmatpush1.msra.mxu0 %v463
    %1049 = vmatprep.subr.mxu0 0.0
    %1050 = vmatpush1.msra.mxu0 %v466
    %1051 = vmatprep.subr.mxu0 0.0
    %1052 = vmatpush1.msra.mxu0 %v469
    %1053 = vmatprep.subr.mxu0 0.0
    %1054 = vmatpush1.msra.mxu0 %v472
    %1055 = vmatprep.subr.mxu0 0.0
    %1056 = vmatpush1.msra.mxu0 %v475
    %1057 = vmatprep.subr.mxu0 0.0
    %1058 = vmatpush1.msra.mxu0 %v478
    %1059 = vmatprep.subr.mxu0 0.0
    %1060 = vmatpush1.msra.mxu0 %v481
    %1061 = vmatprep.subr.mxu0 0.0
    %1062 = vmatpush1.msra.mxu0 %v484
    %1063 = vmatprep.subr.mxu0 0.0
    %1064 = vmatpush1.msra.mxu0 %v487
    %1065 = vmatprep.subr.mxu0 0.0
    %1066 = vmatpush1.msra.mxu0 %v490
    %1067 = vmatprep.subr.mxu0 0.0
    %1068 = vmatpush1.msra.mxu0 %v493
    %1069 = vmatprep.mubr.f32.mxu0 %v109
    %1070 = vmatmul.mubr.f32.gmra.mrb[0].mxu0 %v108
    %v1071 = vpop.f32.mrb[0].mxu0
    %v1072 = vadd.f32 %v1002, %v1071
    %v1073 = vpop.f32.mrb[0].mxu0
    %1074 = vdwg.mxu0
    %v1075 = vmax.f32 %v791, 0.0
    %v1076 = vmax.f32 %v793, 0.0
    %v1077 = vmax.f32 %v1072, 0.0
    %v1078 = vld [vmem:[#allocation6] sm:$0xff]
    %v1079 = vld [vmem:[#allocation6 + $0x8] sm:$0xff]
    %v1080 = vld [vmem:[#allocation6 + $0x10] sm:$0xff]
    %v1081 = vld [vmem:[#allocation6 + $0x18] sm:$0xff]
    %v1082 = vld [vmem:[#allocation6 + $0x20] sm:$0xff]
    %v1083 = vld [vmem:[#allocation6 + $0x28] sm:$0xff]
    %v1084 = vld [vmem:[#allocation6 + $0x30] sm:$0xff]
    %v1085 = vld [vmem:[#allocation6 + $0x38] sm:$0xff]
    %v1086 = vld [vmem:[#allocation6 + $0x40] sm:$0xff]
    %v1087 = vld [vmem:[#allocation6 + $0x48] sm:$0xff]
    %v1088 = vld [vmem:[#allocation6 + $0x50] sm:$0xff]
    %v1089 = vld [vmem:[#allocation6 + $0x58] sm:$0xff]
    %v1090 = vld [vmem:[#allocation6 + $0x60] sm:$0xff]
    %v1091 = vld [vmem:[#allocation6 + $0x68] sm:$0xff]
    %v1092 = vld [vmem:[#allocation6 + $0x70] sm:$0xff]
    %v1093 = vld [vmem:[#allocation6 + $0x78] sm:$0xff]
    %v1094 = vld [vmem:[#allocation6 + $0x80] sm:$0xff]
    %v1095 = vld [vmem:[#allocation6 + $0x88] sm:$0xff]
    %v1096 = vld [vmem:[#allocation6 + $0x90] sm:$0xff]
    %v1097 = vld [vmem:[#allocation6 + $0x98] sm:$0xff]
    %v1098 = vld [vmem:[#allocation6 + $0xa0] sm:$0xff]
    %v1099 = vld [vmem:[#allocation6 + $0xa8] sm:$0xff]
    %v1100 = vld [vmem:[#allocation6 + $0xb0] sm:$0xff]
    %v1101 = vld [vmem:[#allocation6 + $0xb8] sm:$0xff]
    %v1102 = vld [vmem:[#allocation6 + $0xc0] sm:$0xff]
    %v1103 = vld [vmem:[#allocation6 + $0xc8] sm:$0xff]
    %v1104 = vld [vmem:[#allocation6 + $0xd0] sm:$0xff]
    %v1105 = vld [vmem:[#allocation6 + $0xd8] sm:$0xff]
    %v1106 = vld [vmem:[#allocation6 + $0xe0] sm:$0xff]
    %v1107 = vld [vmem:[#allocation6 + $0xe8] sm:$0xff]
    %v1108 = vld [vmem:[#allocation6 + $0xf0] sm:$0xff]
    %v1109 = vld [vmem:[#allocation6 + $0xf8] sm:$0xff]
    %v1110 = vld [vmem:[#allocation6 + $0x100] sm:$0xff]
    %v1111 = vld [vmem:[#allocation6 + $0x108] sm:$0xff]
    %v1112 = vld [vmem:[#allocation6 + $0x110] sm:$0xff]
    %v1113 = vld [vmem:[#allocation6 + $0x118] sm:$0xff]
    %v1114 = vld [vmem:[#allocation6 + $0x120] sm:$0xff]
    %v1115 = vld [vmem:[#allocation6 + $0x128] sm:$0xff]
    %v1116 = vld [vmem:[#allocation6 + $0x130] sm:$0xff]
    %v1117 = vld [vmem:[#allocation6 + $0x138] sm:$0xff]
    %v1118 = vld [vmem:[#allocation6 + $0x140] sm:$0xff]
    %v1119 = vld [vmem:[#allocation6 + $0x148] sm:$0xff]
    %v1120 = vld [vmem:[#allocation6 + $0x150] sm:$0xff]
    %v1121 = vld [vmem:[#allocation6 + $0x158] sm:$0xff]
    %v1122 = vld [vmem:[#allocation6 + $0x160] sm:$0xff]
    %v1123 = vld [vmem:[#allocation6 + $0x168] sm:$0xff]
    %v1124 = vld [vmem:[#allocation6 + $0x170] sm:$0xff]
    %v1125 = vld [vmem:[#allocation6 + $0x178] sm:$0xff]
    %v1126 = vld [vmem:[#allocation7] sm:$0x1]
    %v1128 = vlaneseq
    %v1129 = vshrl.u32 %v1128, 7
    %v1130 = vsub.s32 0, %v1129
    %v1131 = vrot.slane %v1126, %v1130
    %1133 = vmatprep.subr.mxu0 0.0
    %1134 = vmatpush1.msra.mxu0 %v1078
    %1135 = vmatprep.subr.mxu0 0.0
    %1136 = vmatpush1.msra.mxu0 %v1079
    %1137 = vmatprep.subr.mxu0 0.0
    %1138 = vmatpush1.msra.mxu0 %v1080
    %1139 = vmatprep.subr.mxu0 0.0
    %1140 = vmatpush1.msra.mxu0 %v1081
    %1141 = vmatprep.subr.mxu0 0.0
    %1142 = vmatpush1.msra.mxu0 %v1082
    %1143 = vmatprep.subr.mxu0 0.0
    %1144 = vmatpush1.msra.mxu0 %v1083
    %1145 = vmatprep.subr.mxu0 0.0
    %1146 = vmatpush1.msra.mxu0 %v1084
    %1147 = vmatprep.subr.mxu0 0.0
    %1148 = vmatpush1.msra.mxu0 %v1085
    %1149 = vmatprep.subr.mxu0 0.0
    %1150 = vmatpush1.msra.mxu0 %v1086
    %1151 = vmatprep.subr.mxu0 0.0
    %1152 = vmatpush1.msra.mxu0 %v1087
    %1153 = vmatprep.subr.mxu0 0.0
    %1154 = vmatpush1.msra.mxu0 %v1088
    %1155 = vmatprep.subr.mxu0 0.0
    %1156 = vmatpush1.msra.mxu0 %v1089
    %1157 = vmatprep.subr.mxu0 0.0
    %1158 = vmatpush1.msra.mxu0 %v1090
    %1159 = vmatprep.subr.mxu0 0.0
    %1160 = vmatpush1.msra.mxu0 %v1091
    %1161 = vmatprep.subr.mxu0 0.0
    %1162 = vmatpush1.msra.mxu0 %v1092
    %1163 = vmatprep.subr.mxu0 0.0
    %1164 = vmatpush1.msra.mxu0 %v1093
    %1165 = vmatprep.subr.mxu0 0.0
    %1166 = vmatpush1.msra.mxu0 %v1094
    %1167 = vmatprep.subr.mxu0 0.0
    %1168 = vmatpush1.msra.mxu0 %v1095
    %1169 = vmatprep.subr.mxu0 0.0
    %1170 = vmatpush1.msra.mxu0 %v1096
    %1171 = vmatprep.subr.mxu0 0.0
    %1172 = vmatpush1.msra.mxu0 %v1097
    %1173 = vmatprep.subr.mxu0 0.0
    %1174 = vmatpush1.msra.mxu0 %v1098
    %1175 = vmatprep.subr.mxu0 0.0
    %1176 = vmatpush1.msra.mxu0 %v1099
    %1177 = vmatprep.subr.mxu0 0.0
    %1178 = vmatpush1.msra.mxu0 %v1100
    %1179 = vmatprep.subr.mxu0 0.0
    %1180 = vmatpush1.msra.mxu0 %v1101
    %1181 = vmatprep.subr.mxu0 0.0
    %1182 = vmatpush1.msra.mxu0 %v1102
    %1183 = vmatprep.subr.mxu0 0.0
    %1184 = vmatpush1.msra.mxu0 %v1103
    %1185 = vmatprep.subr.mxu0 0.0
    %1186 = vmatpush1.msra.mxu0 %v1104
    %1187 = vmatprep.subr.mxu0 0.0
    %1188 = vmatpush1.msra.mxu0 %v1105
    %1189 = vmatprep.subr.mxu0 0.0
    %1190 = vmatpush1.msra.mxu0 %v1106
    %1191 = vmatprep.subr.mxu0 0.0
    %1192 = vmatpush1.msra.mxu0 %v1107
    %1193 = vmatprep.subr.mxu0 0.0
    %1194 = vmatpush1.msra.mxu0 %v1108
    %1195 = vmatprep.subr.mxu0 0.0
    %1196 = vmatpush1.msra.mxu0 %v1109
    %1197 = vmatprep.mubr.f32.mxu0 %v1076
    %1198 = vmatmul.mubr.f32.gmra.mrb[0].mxu0 %v1075
    %v1199 = vpop.f32.mrb[0].mxu0
    %v1200 = vadd.f32 %v1131, %v1199
    %v1201 = vpop.f32.mrb[0].mxu0
    %1202 = vdwg.mxu0
    %1203 = vmatprep.subr.mxu0 0.0
    %1204 = vmatpush1.msra.mxu0 %v1110
    %1205 = vmatprep.subr.mxu0 0.0
    %1206 = vmatpush1.msra.mxu0 %v1111
    %1207 = vmatprep.subr.mxu0 0.0
    %1208 = vmatpush1.msra.mxu0 %v1112
    %1209 = vmatprep.subr.mxu0 0.0
    %1210 = vmatpush1.msra.mxu0 %v1113
    %1211 = vmatprep.subr.mxu0 0.0
    %1212 = vmatpush1.msra.mxu0 %v1114
    %1213 = vmatprep.subr.mxu0 0.0
    %1214 = vmatpush1.msra.mxu0 %v1115
    %1215 = vmatprep.subr.mxu0 0.0
    %1216 = vmatpush1.msra.mxu0 %v1116
    %1217 = vmatprep.subr.mxu0 0.0
    %1218 = vmatpush1.msra.mxu0 %v1117
    %1219 = vmatprep.subr.mxu0 0.0
    %1220 = vmatpush1.msra.mxu0 %v1118
    %1221 = vmatprep.subr.mxu0 0.0
    %1222 = vmatpush1.msra.mxu0 %v1119
    %1223 = vmatprep.subr.mxu0 0.0
    %1224 = vmatpush1.msra.mxu0 %v1120
    %1225 = vmatprep.subr.mxu0 0.0
    %1226 = vmatpush1.msra.mxu0 %v1121
    %1227 = vmatprep.subr.mxu0 0.0
    %1228 = vmatpush1.msra.mxu0 %v1122
    %1229 = vmatprep.subr.mxu0 0.0
    %1230 = vmatpush1.msra.mxu0 %v1123
    %1231 = vmatprep.subr.mxu0 0.0
    %1232 = vmatpush1.msra.mxu0 %v1124
    %1233 = vmatprep.subr.mxu0 0.0
    %1234 = vmatpush1.msra.mxu0 %v1125
    %1235 = vmatprep.subr.mxu0 0.0
    %1236 = vmatpush1.msra.mxu0 0.0
    %1237 = vmatprep.subr.mxu0 0.0
    %1238 = vmatpush1.msra.mxu0 0.0
    %1239 = vmatprep.subr.mxu0 0.0
    %1240 = vmatpush1.msra.mxu0 0.0
    %1241 = vmatprep.subr.mxu0 0.0
    %1242 = vmatpush1.msra.mxu0 0.0
    %1243 = vmatprep.subr.mxu0 0.0
    %1244 = vmatpush1.msra.mxu0 0.0
    %1245 = vmatprep.subr.mxu0 0.0
    %1246 = vmatpush1.msra.mxu0 0.0
    %1247 = vmatprep.subr.mxu0 0.0
    %1248 = vmatpush1.msra.mxu0 0.0
    %1249 = vmatprep.subr.mxu0 0.0
    %1250 = vmatpush1.msra.mxu0 0.0
    %1251 = vmatprep.subr.mxu0 0.0
    %1252 = vmatpush1.msra.mxu0 0.0
    %1253 = vmatprep.subr.mxu0 0.0
    %1254 = vmatpush1.msra.mxu0 0.0
    %1255 = vmatprep.subr.mxu0 0.0
    %1256 = vmatpush1.msra.mxu0 0.0
    %1257 = vmatprep.subr.mxu0 0.0
    %1258 = vmatpush1.msra.mxu0 0.0
    %1259 = vmatprep.subr.mxu0 0.0
    %1260 = vmatpush1.msra.mxu0 0.0
    %1261 = vmatprep.subr.mxu0 0.0
    %1262 = vmatpush1.msra.mxu0 0.0
    %1263 = vmatprep.subr.mxu0 0.0
    %1264 = vmatpush1.msra.mxu0 0.0
    %1265 = vmatprep.subr.mxu0 0.0
    %1266 = vmatpush1.msra.mxu0 0.0
    %1267 = vmatprep.mubr.f32.mxu0 0.0
    %1268 = vmatmul.mubr.f32.gmra.mrb[0].mxu0 %v1077
    %v1269 = vpop.f32.mrb[0].mxu0
    %v1270 = vadd.f32 %v1200, %v1269
    %v1271 = vpop.f32.mrb[0].mxu0
    %1272 = vdwg.mxu0
    %v1273 = vmax.f32 %v1270, 0.0
    %v1274 = vld [vmem:[#allocation9] sm:$0xff]
    %v1275 = vld [vmem:[#allocation9 + $0x8] sm:$0xff]
    %v1276 = vld [vmem:[#allocation9 + $0x10] sm:$0xff]
    %v1277 = vld [vmem:[#allocation9 + $0x18] sm:$0xff]
    %v1278 = vld [vmem:[#allocation9 + $0x20] sm:$0xff]
    %v1279 = vld [vmem:[#allocation9 + $0x28] sm:$0xff]
    %v1280 = vld [vmem:[#allocation9 + $0x30] sm:$0xff]
    %v1281 = vld [vmem:[#allocation9 + $0x38] sm:$0xff]
    %v1282 = vld [vmem:[#allocation9 + $0x40] sm:$0xff]
    %v1283 = vld [vmem:[#allocation9 + $0x48] sm:$0xff]
    %v1284 = vld [vmem:[#allocation9 + $0x50] sm:$0xff]
    %v1285 = vld [vmem:[#allocation9 + $0x58] sm:$0xff]
    %v1286 = vld [vmem:[#allocation9 + $0x60] sm:$0xff]
    %v1287 = vld [vmem:[#allocation9 + $0x68] sm:$0xff]
    %v1288 = vld [vmem:[#allocation9 + $0x70] sm:$0xff]
    %v1289 = vld [vmem:[#allocation9 + $0x78] sm:$0xff]
    %v1290 = vld [vmem:[#allocation10] sm:$0x1]
    %v1292 = vlaneseq
    %v1293 = vshrl.u32 %v1292, 7
    %v1294 = vsub.s32 0, %v1293
    %v1295 = vrot.slane %v1290, %v1294
    %1297 = vmatprep.subr.mxu0 0.0
    %1298 = vmatpush1.msra.mxu0 %v1274
    %1299 = vmatprep.subr.mxu0 0.0
    %1300 = vmatpush1.msra.mxu0 %v1275
    %1301 = vmatprep.subr.mxu0 0.0
    %1302 = vmatpush1.msra.mxu0 %v1276
    %1303 = vmatprep.subr.mxu0 0.0
    %1304 = vmatpush1.msra.mxu0 %v1277
    %1305 = vmatprep.subr.mxu0 0.0
    %1306 = vmatpush1.msra.mxu0 %v1278
    %1307 = vmatprep.subr.mxu0 0.0
    %1308 = vmatpush1.msra.mxu0 %v1279
    %1309 = vmatprep.subr.mxu0 0.0
    %1310 = vmatpush1.msra.mxu0 %v1280
    %1311 = vmatprep.subr.mxu0 0.0
    %1312 = vmatpush1.msra.mxu0 %v1281
    %1313 = vmatprep.subr.mxu0 0.0
    %1314 = vmatpush1.msra.mxu0 %v1282
    %1315 = vmatprep.subr.mxu0 0.0
    %1316 = vmatpush1.msra.mxu0 %v1283
    %1317 = vmatprep.subr.mxu0 0.0
    %1318 = vmatpush1.msra.mxu0 %v1284
    %1319 = vmatprep.subr.mxu0 0.0
    %1320 = vmatpush1.msra.mxu0 %v1285
    %1321 = vmatprep.subr.mxu0 0.0
    %1322 = vmatpush1.msra.mxu0 %v1286
    %1323 = vmatprep.subr.mxu0 0.0
    %1324 = vmatpush1.msra.mxu0 %v1287
    %1325 = vmatprep.subr.mxu0 0.0
    %1326 = vmatpush1.msra.mxu0 %v1288
    %1327 = vmatprep.subr.mxu0 0.0
    %1328 = vmatpush1.msra.mxu0 %v1289
    %1329 = vmatprep.subr.mxu0 0.0
    %1330 = vmatpush1.msra.mxu0 0.0
    %1331 = vmatprep.subr.mxu0 0.0
    %1332 = vmatpush1.msra.mxu0 0.0
    %1333 = vmatprep.subr.mxu0 0.0
    %1334 = vmatpush1.msra.mxu0 0.0
    %1335 = vmatprep.subr.mxu0 0.0
    %1336 = vmatpush1.msra.mxu0 0.0
    %1337 = vmatprep.subr.mxu0 0.0
    %1338 = vmatpush1.msra.mxu0 0.0
    %1339 = vmatprep.subr.mxu0 0.0
    %1340 = vmatpush1.msra.mxu0 0.0
    %1341 = vmatprep.subr.mxu0 0.0
    %1342 = vmatpush1.msra.mxu0 0.0
    %1343 = vmatprep.subr.mxu0 0.0
    %1344 = vmatpush1.msra.mxu0 0.0
    %1345 = vmatprep.subr.mxu0 0.0
    %1346 = vmatpush1.msra.mxu0 0.0
    %1347 = vmatprep.subr.mxu0 0.0
    %1348 = vmatpush1.msra.mxu0 0.0
    %1349 = vmatprep.subr.mxu0 0.0
    %1350 = vmatpush1.msra.mxu0 0.0
    %1351 = vmatprep.subr.mxu0 0.0
    %1352 = vmatpush1.msra.mxu0 0.0
    %1353 = vmatprep.subr.mxu0 0.0
    %1354 = vmatpush1.msra.mxu0 0.0
    %1355 = vmatprep.subr.mxu0 0.0
    %1356 = vmatpush1.msra.mxu0 0.0
    %1357 = vmatprep.subr.mxu0 0.0
    %1358 = vmatpush1.msra.mxu0 0.0
    %1359 = vmatprep.subr.mxu0 0.0
    %1360 = vmatpush1.msra.mxu0 0.0
    %1361 = vmatprep.mubr.f32.mxu0 0.0
    %1362 = vmatmul.mubr.f32.gmra.mrb[0].mxu0 %v1273
    %v1363 = vpop.f32.mrb[0].mxu0
    %v1364 = vadd.f32 %v1295, %v1363
    %v1365 = vpop.f32.mrb[0].mxu0
    %1366 = vdwg.mxu0
    %1367 = vst [vmem:[%s7] sm:$0xff] %v1364
    // Predicated region
    $region54: #{intermediate_noisy_mlp_forward.1} parent=1 // pred_check
      _
    $region55: #{intermediate_noisy_mlp_forward.1} parent=1 // pred_check_branch
      %1369 = sbr.rel (0) target = $region57
    $region56: #{intermediate_noisy_mlp_forward.1} parent=1 // pred_region
      _
    $region57: #{intermediate_noisy_mlp_forward.1} parent=1 // pred_fallthru
      _
    // Predicated region
    $region58: #{intermediate_noisy_mlp_forward.1} parent=1 // pred_check
      _
    $region59: #{intermediate_noisy_mlp_forward.1} parent=1 // pred_check_branch
      %1371 = sbr.rel (0) target = $region61
    $region60: #{intermediate_noisy_mlp_forward.1} parent=1 // pred_region
      _
    $region61: #{intermediate_noisy_mlp_forward.1} parent=1 // pred_fallthru
      _
    %1372 = vsyncpa [#allocation3], 1
    %1373 = vsyncpa [#allocation5], 1
    %1374 = vsyncpa [#allocation8], 1
    %1375 = vsyncpa [#allocation11], 1

</llo_original>
